<compile_context>
chip_gen: v5e
topology: v5e:2x2
jax: 0.10.0
libtpu: 0.0.40
codegen_flags: <defaults>
</compile_context>

<pallas_src>
import functools

import jax
import jax.numpy as jnp
from jax.experimental import pallas as pl
from jax.experimental.pallas import tpu as pltpu


def _cdiv(a, b):
    return -(-a // b)


def _round_up(a, b):
    return _cdiv(a, b) * b


def _next_pow2(n):
    p = 1
    while p < n:
        p *= 2
    return p


def _graph_mix_lanes():
    """Sub-block lane width for the graph mix ~= MXU contraction depth
    (256 on v6e/v7x, 128 on older parts).  128 is always a valid fallback."""
    try:
        kind = jax.devices()[0].device_kind.lower()
    except Exception:
        return 128
    return 256 if any(tag in kind for tag in ("v6", "v7", "7x")) else 128


def _vmem_budget():
    """(tile budget, scoped vmem limit) derived from the actual part's VMEM."""
    cap = 64 * 1024 * 1024          # conservative default = v7x per-TensorCore VMEM
    try:
        info = pltpu.get_tpu_info()
        cap = int(getattr(info, "vmem_capacity_bytes", cap)) or cap
    except Exception:
        pass
    return int(cap * 0.6), int(cap * 0.75)


def _plan_t_tile(T, n_batch, Vp, Cp, C_out, K, t_sub, in_bytes, out_bytes,
                 budget_bytes, t_tile_req=None):
    """Pick t_tile (a multiple of t_sub) and padded T so every streamed tile fits
    the VMEM budget and every lane width is 128-aligned.  Returns (t_tile, T_pad)."""
    tsv = t_sub * Vp

    def tile_vmem(tt):
        stream = 2 * tt * Vp * (Cp * in_bytes + C_out * out_bytes)              # dbl-buffered x / out
        resident = (tsv * K * tsv + C_out * K * Cp + K * Cp * tsv) * in_bytes   # A_bd, W_flat, scratch
        resident += 2 * C_out * tsv * 4                                         # folded bias
        live = (Cp * (K + 1) * tsv + C_out * tsv) * 4                           # z_all / x_sub / out_sub
        return stream + resident + live

    if t_tile_req is not None:
        assert t_tile_req > 0 and t_tile_req % t_sub == 0, (
            f"t_tile must be a positive multiple of t_sub={t_sub}")
        assert tile_vmem(t_tile_req) <= budget_bytes, "requested t_tile exceeds the VMEM budget"
        return t_tile_req, _cdiv(T, t_tile_req) * t_tile_req

    n_sub_total = _cdiv(T, t_sub)
    # Cap the streamed tile at ~2048 lanes: HBM-roofline efficiency saturates around
    # 512-1024 lanes and the sub-block loop is statically unrolled in the kernel.
    m_cap = max(1, min(n_sub_total, max(1, 2048 // tsv)))
    m = 1
    while m < m_cap and tile_vmem((m + 1) * t_sub) <= budget_bytes:
        m += 1
    assert tile_vmem(m * t_sub) <= budget_bytes, (
        "a single graph-mix sub-block does not fit the VMEM budget")
    n_tiles = _cdiv(n_sub_total, m)
    if n_batch == 1 and n_tiles == 1 and n_sub_total > 1:
        n_tiles = 2          # keep >= 2 steps on the parallel grid (v7x has 2 TensorCores)
    m = _cdiv(n_sub_total, n_tiles)
    return m * t_sub, n_tiles * m * t_sub


def _tgcn_kernel(x_ref, abd_ref, w_ref, b_ref, o_ref, z_ref, *, K, Cp, n_sub, tsv):
    """One (n, t-tile) block.

    x_ref:   (Cp, n_sub*tsv)     input slab, lane-dense ((T, Vp) flattened)
    abd_ref: (tsv, K*tsv)        block-diagonal adjacency concat_k(I_{t_sub} (x) A_k)
    w_ref:   (C_out, K*Cp)       1x1-conv weight, W_flat[c, k*Cp + ci] = W[k, c, ci]
    b_ref:   (C_out, tsv)        conv bias folded through A, tiled to one sub-block
    o_ref:   (C_out, n_sub*tsv)  output slab, lane-dense
    z_ref:   (K*Cp, tsv)         VMEM scratch: per-k graph-mixed slices stacked on sublanes
    """
    a_bd = abd_ref[...]                                   # small residents, hoisted out of loop
    w_flat = w_ref[...]
    bias = b_ref[...].astype(jnp.float32)

    for s in range(n_sub):                                # static unroll, all slices 128-aligned
        lo = s * tsv
        x_sub = x_ref[:, lo:lo + tsv]                     # (Cp, tsv)
        # Graph mix: contraction depth = tsv (128/256) instead of V; per-k output
        # slices land lane-aligned and already in (Cp, tsv) layout (no reshapes).
        z_all = jnp.dot(x_sub, a_bd, preferred_element_type=jnp.float32)   # (Cp, K*tsv)
        for k in range(K):
            z_ref[k * Cp:(k + 1) * Cp, :] = (
                z_all[:, k * tsv:(k + 1) * tsv].astype(z_ref.dtype))
        # Channel mix: one fused K*Cp-deep matmul; the K-way sum is the MXU accumulator.
        out_sub = jnp.dot(w_flat, z_ref[...], preferred_element_type=jnp.float32) + bias
        o_ref[:, lo:lo + tsv] = out_sub.astype(o_ref.dtype)


def conv_temporal_graphical(x, A, weight, bias, kernel_size, *, t_tile=None,
                            compute_dtype=jnp.float32):
    """x: (N, C_in, T, V), A: (K, V, V), weight: (K*C_out, C_in), bias: (K*C_out,).
    Returns ((N, C_out, T, V), A) — the module forward with the default temporal conv."""
    orig_dtype = x.dtype
    N, C_in, T, V = x.shape
    K = int(kernel_size)
    KC, Cw = weight.shape
    assert A.shape == (K, V, V), "A must be (K, V, V) with K == kernel_size"
    assert KC % K == 0 and Cw == C_in and bias.shape == (KC,)
    C_out = KC // K

    in_bytes = jnp.dtype(compute_dtype).itemsize
    out_bytes = jnp.dtype(orig_dtype).itemsize

    # ---- layout planning ---------------------------------------------------
    Vp = max(8, _next_pow2(V))                  # node axis padded -> 128-aligned sub-blocks
    c_align = 16 if in_bytes == 2 else 8
    Cp = _round_up(C_in, c_align)               # sublane-aligned channel slabs in the scratch
    lanes = _graph_mix_lanes()
    t_sub = max(1, lanes // Vp)
    tsv = t_sub * Vp                            # graph-mix sub-block lane width (mult of 128)

    budget, vmem_limit = _vmem_budget()
    t_tile, T_pad = _plan_t_tile(T, N, Vp, Cp, C_out, K, t_sub, in_bytes, out_bytes,
                                 budget, t_tile)
    n_tiles = T_pad // t_tile
    n_sub = t_tile // t_sub
    TV_tile = t_tile * Vp

    # ---- operand prep (contiguous pads / reshapes only; no HBM transposes of x) ----
    if (Cp, T_pad, Vp) != (C_in, T, V):
        x = jnp.pad(x, ((0, 0), (0, Cp - C_in), (0, T_pad - T), (0, Vp - V)))
    x_flat = x.reshape(N, Cp, T_pad * Vp).astype(compute_dtype)

    A_pad = jnp.pad(A, ((0, 0), (0, Vp - V), (0, Vp - V))) if Vp != V else A
    eye = jnp.eye(t_sub, dtype=A.dtype)
    a_bd = jnp.einsum('ts,kvw->ktvsw', eye, A_pad).reshape(K, tsv, tsv)
    a_bd = a_bd.transpose(1, 0, 2).reshape(tsv, K * tsv).astype(compute_dtype)

    w3 = weight.reshape(K, C_out, C_in)
    if Cp != C_in:
        w3 = jnp.pad(w3, ((0, 0), (0, 0), (0, Cp - C_in)))
    w_flat = w3.transpose(1, 0, 2).reshape(C_out, K * Cp).astype(compute_dtype)

    # Fold the conv bias through the graph conv: b_eff[c, w] = sum_k b[k,c] * sum_v A[k,v,w].
    b_eff = jnp.einsum('kc,kw->cw', bias.reshape(K, C_out), A_pad.sum(axis=1))
    b_tile = jnp.tile(b_eff, (1, t_sub)).astype(jnp.float32)        # (C_out, tsv), sub-block sized

    kernel = functools.partial(_tgcn_kernel, K=K, Cp=Cp, n_sub=n_sub, tsv=tsv)

    out_flat = pl.pallas_call(
        kernel,
        out_shape=jax.ShapeDtypeStruct((N, C_out, T_pad * Vp), orig_dtype),
        grid_spec=pltpu.PrefetchScalarGridSpec(
            num_scalar_prefetch=0,
            grid=(N, n_tiles),
            in_specs=[
                # streamed, lane-dense input slab (leading N dim squeezed)
                # TODO(synk): pipeline_mode=pl.Buffered(3) for tiny-C_in layers if VMEM allows.
                pl.BlockSpec((None, Cp, TV_tile), lambda n, t: (n, 0, t)),
                # block-diagonal adjacency / weights / folded bias: small, fully resident
                pl.BlockSpec((tsv, K * tsv), lambda n, t: (0, 0)),
                pl.BlockSpec((C_out, K * Cp), lambda n, t: (0, 0)),
                pl.BlockSpec((C_out, tsv), lambda n, t: (0, 0)),
            ],
            out_specs=pl.BlockSpec((None, C_out, TV_tile), lambda n, t: (n, 0, t)),
            scratch_shapes=[pltpu.VMEM((K * Cp, tsv), compute_dtype)],
        ),
        compiler_params=pltpu.CompilerParams(
            dimension_semantics=("parallel", "parallel"),
            vmem_limit_bytes=vmem_limit),
    )(x_flat, a_bd, w_flat, b_tile)

    out = out_flat.reshape(N, C_out, T_pad, Vp)[:, :, :T, :V]
    return out, A


def reference(x, A, weight, bias, K):
    """Pure-JAX reference mirroring the PyTorch forward."""
    N, C_in, T, V = x.shape
    C_out = weight.shape[0] // K
    y = jnp.einsum('dc,nctv->ndtv', weight, x) + bias[None, :, None, None]
    y = y.reshape(N, K, C_out, T, V)
    return jnp.einsum('nkctv,kvw->nctw', y, A)


if __name__ == "__main__":
    # Small shapes consistent with the module.  V=18 (OpenPose skeleton) exercises the
    # node-axis padding path; C_in=6 exercises the channel-slab padding path.
    N, C_in, C_out, T, V, K = 2, 6, 16, 32, 18, 3

    key = jax.random.PRNGKey(0)
    kx, ka, kw, kb = jax.random.split(key, 4)
    x = jax.random.normal(kx, (N, C_in, T, V), dtype=jnp.float32)
    A = jax.random.normal(ka, (K, V, V), dtype=jnp.float32)
    # nn.Conv2d(C_in, C_out*K, kernel_size=(1,1)) -> weight (K*C_out, C_in), bias (K*C_out,)
    weight = jax.random.normal(kw, (K * C_out, C_in), dtype=jnp.float32) * 0.1
    bias = jax.random.normal(kb, (K * C_out,), dtype=jnp.float32) * 0.1

    ref = reference(x, A, weight, bias, K)

    # 1) f32, auto-planned tiling.
    out, A_out = conv_temporal_graphical(x, A, weight, bias, K)
    out = jax.block_until_ready(out)
    assert out.shape == (N, C_out, T, V) and A_out.shape == (K, V, V)
    assert jnp.allclose(out, ref, atol=2e-4, rtol=2e-4), "f32 mismatch vs reference"

    # 2) f32, forced multi-tile grid over T (exercises the (N, T-tile) pipeline).
    out2, _ = conv_temporal_graphical(x, A, weight, bias, K, t_tile=16)
    out2 = jax.block_until_ready(out2)
    assert jnp.allclose(out2, ref, atol=2e-4, rtol=2e-4), "f32 (tiled) mismatch vs reference"

    # 3) bf16 MXU path (inputs rounded to bf16, accumulation in f32).
    out_bf, _ = conv_temporal_graphical(x, A, weight, bias, K, compute_dtype=jnp.bfloat16)
    out_bf = jax.block_until_ready(out_bf)
    rnd = lambda a: a.astype(jnp.bfloat16).astype(jnp.float32)
    ref_bf = reference(rnd(x), rnd(A), rnd(weight), bias, K)
    assert jnp.allclose(out_bf, ref_bf, atol=5e-2, rtol=5e-2), "bf16 mismatch vs reference"

    print("KERNEL_OK")
</pallas_src>

<mosaic_0001>
module attributes {stable_mosaic.version = 11 : i64} {
  func.func @_tgcn_kernel(%arg0: i32, %arg1: i32, %arg2: memref<1x8x1024xf32, #tpu.memory_space<vmem>>, %arg3: memref<128x384xf32, #tpu.memory_space<vmem>>, %arg4: memref<16x24xf32, #tpu.memory_space<vmem>>, %arg5: memref<16x128xf32, #tpu.memory_space<vmem>>, %arg6: memref<1x16x1024xf32, #tpu.memory_space<vmem>>, %arg7: memref<24x128xf32, #tpu.memory_space<vmem>>) attributes {dimension_semantics = [#tpu.dimension_semantics<parallel>, #tpu.dimension_semantics<parallel>], iteration_bounds = array<i64: 2, 1>, scalar_prefetch = 0 : i64, scratch_operands = 1 : i64, tpu.core_type = #tpu.core_type<tc>, window_params = [{transform_indices = @transform_0, window_bounds = array<i64: 1, 8, 1024>}, {pipeline_mode = #tpu.pipeline_mode<synchronous>, transform_indices = @transform_1, window_bounds = array<i64: 128, 384>}, {pipeline_mode = #tpu.pipeline_mode<synchronous>, transform_indices = @transform_2, window_bounds = array<i64: 16, 24>}, {pipeline_mode = #tpu.pipeline_mode<synchronous>, transform_indices = @transform_3, window_bounds = array<i64: 16, 128>}, {transform_indices = @transform_4, window_bounds = array<i64: 1, 16, 1024>}]} {
    %c0 = arith.constant 0 : index
    %c0_0 = arith.constant 0 : index
    %0 = vector.load %arg3[%c0, %c0_0] : memref<128x384xf32, #tpu.memory_space<vmem>>, vector<128x384xf32>
    %c0_1 = arith.constant 0 : index
    %c0_2 = arith.constant 0 : index
    %1 = vector.load %arg4[%c0_1, %c0_2] : memref<16x24xf32, #tpu.memory_space<vmem>>, vector<16x24xf32>
    %c0_3 = arith.constant 0 : index
    %c0_4 = arith.constant 0 : index
    %2 = vector.load %arg5[%c0_3, %c0_4] : memref<16x128xf32, #tpu.memory_space<vmem>>, vector<16x128xf32>
    %c0_5 = arith.constant 0 : index
    %c0_6 = arith.constant 0 : index
    %c0_7 = arith.constant 0 : index
    %3 = vector.load %arg2[%c0_5, %c0_6, %c0_7] : memref<1x8x1024xf32, #tpu.memory_space<vmem>>, vector<1x8x128xf32>
    %4 = vector.shape_cast %3 : vector<1x8x128xf32> to vector<8x128xf32>
    %cst = arith.constant dense<0.000000e+00> : vector<8x384xf32>
    %5 = tpu.matmul %4, %0, %cst {dimension_numbers = #tpu.dot_dimension_numbers<[1], [0], [0], [1], [0, 0, 1, 1], [], []>} : vector<8x128xf32>, vector<128x384xf32>, vector<8x384xf32> -> vector<8x384xf32>
    %6 = vector.extract_strided_slice %5 {offsets = [0, 0], sizes = [8, 128], strides = [1, 1]} : vector<8x384xf32> to vector<8x128xf32>
    %c0_8 = arith.constant 0 : index
    %c0_9 = arith.constant 0 : index
    %7 = vector.load %arg7[%c0_8, %c0_9] : memref<24x128xf32, #tpu.memory_space<vmem>>, vector<8x128xf32>
    tpu.vector_store %arg7[%c0_8, %c0_9], %6 {strides = array<i32>} : memref<24x128xf32, #tpu.memory_space<vmem>>, vector<8x128xf32>,
    %8 = vector.extract_strided_slice %5 {offsets = [0, 128], sizes = [8, 128], strides = [1, 1]} : vector<8x384xf32> to vector<8x128xf32>
    %c8 = arith.constant 8 : index
    %c0_10 = arith.constant 0 : index
    %9 = vector.load %arg7[%c8, %c0_10] : memref<24x128xf32, #tpu.memory_space<vmem>>, vector<8x128xf32>
    tpu.vector_store %arg7[%c8, %c0_10], %8 {strides = array<i32>} : memref<24x128xf32, #tpu.memory_space<vmem>>, vector<8x128xf32>,
    %10 = vector.extract_strided_slice %5 {offsets = [0, 256], sizes = [8, 128], strides = [1, 1]} : vector<8x384xf32> to vector<8x128xf32>
    %c16 = arith.constant 16 : index
    %c0_11 = arith.constant 0 : index
    %11 = vector.load %arg7[%c16, %c0_11] : memref<24x128xf32, #tpu.memory_space<vmem>>, vector<8x128xf32>
    tpu.vector_store %arg7[%c16, %c0_11], %10 {strides = array<i32>} : memref<24x128xf32, #tpu.memory_space<vmem>>, vector<8x128xf32>,
    %c0_12 = arith.constant 0 : index
    %c0_13 = arith.constant 0 : index
    %12 = vector.load %arg7[%c0_12, %c0_13] : memref<24x128xf32, #tpu.memory_space<vmem>>, vector<24x128xf32>
    %cst_14 = arith.constant dense<0.000000e+00> : vector<16x128xf32>
    %13 = tpu.matmul %1, %12, %cst_14 {dimension_numbers = #tpu.dot_dimension_numbers<[1], [0], [0], [1], [0, 0, 1, 1], [], []>} : vector<16x24xf32>, vector<24x128xf32>, vector<16x128xf32> -> vector<16x128xf32>
    %14 = arith.addf %13, %2 : vector<16x128xf32>
    %c0_15 = arith.constant 0 : index
    %c0_16 = arith.constant 0 : index
    %c0_17 = arith.constant 0 : index
    %15 = vector.load %arg6[%c0_15, %c0_16, %c0_17] : memref<1x16x1024xf32, #tpu.memory_space<vmem>>, vector<1x16x128xf32>
    %16 = vector.shape_cast %15 : vector<1x16x128xf32> to vector<16x128xf32>
    %17 = vector.shape_cast %14 : vector<16x128xf32> to vector<1x16x128xf32>
    tpu.vector_store %arg6[%c0_15, %c0_16, %c0_17], %17 {strides = array<i32>} : memref<1x16x1024xf32, #tpu.memory_space<vmem>>, vector<1x16x128xf32>,
    %c0_18 = arith.constant 0 : index
    %c0_19 = arith.constant 0 : index
    %c128 = arith.constant 128 : index
    %18 = vector.load %arg2[%c0_18, %c0_19, %c128] : memref<1x8x1024xf32, #tpu.memory_space<vmem>>, vector<1x8x128xf32>
    %19 = vector.shape_cast %18 : vector<1x8x128xf32> to vector<8x128xf32>
    %cst_20 = arith.constant dense<0.000000e+00> : vector<8x384xf32>
    %20 = tpu.matmul %19, %0, %cst_20 {dimension_numbers = #tpu.dot_dimension_numbers<[1], [0], [0], [1], [0, 0, 1, 1], [], []>} : vector<8x128xf32>, vector<128x384xf32>, vector<8x384xf32> -> vector<8x384xf32>
    %21 = vector.extract_strided_slice %20 {offsets = [0, 0], sizes = [8, 128], strides = [1, 1]} : vector<8x384xf32> to vector<8x128xf32>
    %c0_21 = arith.constant 0 : index
    %c0_22 = arith.constant 0 : index
    %22 = vector.load %arg7[%c0_21, %c0_22] : memref<24x128xf32, #tpu.memory_space<vmem>>, vector<8x128xf32>
    tpu.vector_store %arg7[%c0_21, %c0_22], %21 {strides = array<i32>} : memref<24x128xf32, #tpu.memory_space<vmem>>, vector<8x128xf32>,
    %23 = vector.extract_strided_slice %20 {offsets = [0, 128], sizes = [8, 128], strides = [1, 1]} : vector<8x384xf32> to vector<8x128xf32>
    %c8_23 = arith.constant 8 : index
    %c0_24 = arith.constant 0 : index
    %24 = vector.load %arg7[%c8_23, %c0_24] : memref<24x128xf32, #tpu.memory_space<vmem>>, vector<8x128xf32>
    tpu.vector_store %arg7[%c8_23, %c0_24], %23 {strides = array<i32>} : memref<24x128xf32, #tpu.memory_space<vmem>>, vector<8x128xf32>,
    %25 = vector.extract_strided_slice %20 {offsets = [0, 256], sizes = [8, 128], strides = [1, 1]} : vector<8x384xf32> to vector<8x128xf32>
    %c16_25 = arith.constant 16 : index
    %c0_26 = arith.constant 0 : index
    %26 = vector.load %arg7[%c16_25, %c0_26] : memref<24x128xf32, #tpu.memory_space<vmem>>, vector<8x128xf32>
    tpu.vector_store %arg7[%c16_25, %c0_26], %25 {strides = array<i32>} : memref<24x128xf32, #tpu.memory_space<vmem>>, vector<8x128xf32>,
    %c0_27 = arith.constant 0 : index
    %c0_28 = arith.constant 0 : index
    %27 = vector.load %arg7[%c0_27, %c0_28] : memref<24x128xf32, #tpu.memory_space<vmem>>, vector<24x128xf32>
    %cst_29 = arith.constant dense<0.000000e+00> : vector<16x128xf32>
    %28 = tpu.matmul %1, %27, %cst_29 {dimension_numbers = #tpu.dot_dimension_numbers<[1], [0], [0], [1], [0, 0, 1, 1], [], []>} : vector<16x24xf32>, vector<24x128xf32>, vector<16x128xf32> -> vector<16x128xf32>
    %29 = arith.addf %28, %2 : vector<16x128xf32>
    %c0_30 = arith.constant 0 : index
    %c0_31 = arith.constant 0 : index
    %c128_32 = arith.constant 128 : index
    %30 = vector.load %arg6[%c0_30, %c0_31, %c128_32] : memref<1x16x1024xf32, #tpu.memory_space<vmem>>, vector<1x16x128xf32>
    %31 = vector.shape_cast %30 : vector<1x16x128xf32> to vector<16x128xf32>
    %32 = vector.shape_cast %29 : vector<16x128xf32> to vector<1x16x128xf32>
    tpu.vector_store %arg6[%c0_30, %c0_31, %c128_32], %32 {strides = array<i32>} : memref<1x16x1024xf32, #tpu.memory_space<vmem>>, vector<1x16x128xf32>,
    %c0_33 = arith.constant 0 : index
    %c0_34 = arith.constant 0 : index
    %c256 = arith.constant 256 : index
    %33 = vector.load %arg2[%c0_33, %c0_34, %c256] : memref<1x8x1024xf32, #tpu.memory_space<vmem>>, vector<1x8x128xf32>
    %34 = vector.shape_cast %33 : vector<1x8x128xf32> to vector<8x128xf32>
    %cst_35 = arith.constant dense<0.000000e+00> : vector<8x384xf32>
    %35 = tpu.matmul %34, %0, %cst_35 {dimension_numbers = #tpu.dot_dimension_numbers<[1], [0], [0], [1], [0, 0, 1, 1], [], []>} : vector<8x128xf32>, vector<128x384xf32>, vector<8x384xf32> -> vector<8x384xf32>
    %36 = vector.extract_strided_slice %35 {offsets = [0, 0], sizes = [8, 128], strides = [1, 1]} : vector<8x384xf32> to vector<8x128xf32>
    %c0_36 = arith.constant 0 : index
    %c0_37 = arith.constant 0 : index
    %37 = vector.load %arg7[%c0_36, %c0_37] : memref<24x128xf32, #tpu.memory_space<vmem>>, vector<8x128xf32>
    tpu.vector_store %arg7[%c0_36, %c0_37], %36 {strides = array<i32>} : memref<24x128xf32, #tpu.memory_space<vmem>>, vector<8x128xf32>,
    %38 = vector.extract_strided_slice %35 {offsets = [0, 128], sizes = [8, 128], strides = [1, 1]} : vector<8x384xf32> to vector<8x128xf32>
    %c8_38 = arith.constant 8 : index
    %c0_39 = arith.constant 0 : index
    %39 = vector.load %arg7[%c8_38, %c0_39] : memref<24x128xf32, #tpu.memory_space<vmem>>, vector<8x128xf32>
    tpu.vector_store %arg7[%c8_38, %c0_39], %38 {strides = array<i32>} : memref<24x128xf32, #tpu.memory_space<vmem>>, vector<8x128xf32>,
    %40 = vector.extract_strided_slice %35 {offsets = [0, 256], sizes = [8, 128], strides = [1, 1]} : vector<8x384xf32> to vector<8x128xf32>
    %c16_40 = arith.constant 16 : index
    %c0_41 = arith.constant 0 : index
    %41 = vector.load %arg7[%c16_40, %c0_41] : memref<24x128xf32, #tpu.memory_space<vmem>>, vector<8x128xf32>
    tpu.vector_store %arg7[%c16_40, %c0_41], %40 {strides = array<i32>} : memref<24x128xf32, #tpu.memory_space<vmem>>, vector<8x128xf32>,
    %c0_42 = arith.constant 0 : index
    %c0_43 = arith.constant 0 : index
    %42 = vector.load %arg7[%c0_42, %c0_43] : memref<24x128xf32, #tpu.memory_space<vmem>>, vector<24x128xf32>
    %cst_44 = arith.constant dense<0.000000e+00> : vector<16x128xf32>
    %43 = tpu.matmul %1, %42, %cst_44 {dimension_numbers = #tpu.dot_dimension_numbers<[1], [0], [0], [1], [0, 0, 1, 1], [], []>} : vector<16x24xf32>, vector<24x128xf32>, vector<16x128xf32> -> vector<16x128xf32>
    %44 = arith.addf %43, %2 : vector<16x128xf32>
    %c0_45 = arith.constant 0 : index
    %c0_46 = arith.constant 0 : index
    %c256_47 = arith.constant 256 : index
    %45 = vector.load %arg6[%c0_45, %c0_46, %c256_47] : memref<1x16x1024xf32, #tpu.memory_space<vmem>>, vector<1x16x128xf32>
    %46 = vector.shape_cast %45 : vector<1x16x128xf32> to vector<16x128xf32>
    %47 = vector.shape_cast %44 : vector<16x128xf32> to vector<1x16x128xf32>
    tpu.vector_store %arg6[%c0_45, %c0_46, %c256_47], %47 {strides = array<i32>} : memref<1x16x1024xf32, #tpu.memory_space<vmem>>, vector<1x16x128xf32>,
    %c0_48 = arith.constant 0 : index
    %c0_49 = arith.constant 0 : index
    %c384 = arith.constant 384 : index
    %48 = vector.load %arg2[%c0_48, %c0_49, %c384] : memref<1x8x1024xf32, #tpu.memory_space<vmem>>, vector<1x8x128xf32>
    %49 = vector.shape_cast %48 : vector<1x8x128xf32> to vector<8x128xf32>
    %cst_50 = arith.constant dense<0.000000e+00> : vector<8x384xf32>
    %50 = tpu.matmul %49, %0, %cst_50 {dimension_numbers = #tpu.dot_dimension_numbers<[1], [0], [0], [1], [0, 0, 1, 1], [], []>} : vector<8x128xf32>, vector<128x384xf32>, vector<8x384xf32> -> vector<8x384xf32>
    %51 = vector.extract_strided_slice %50 {offsets = [0, 0], sizes = [8, 128], strides = [1, 1]} : vector<8x384xf32> to vector<8x128xf32>
    %c0_51 = arith.constant 0 : index
    %c0_52 = arith.constant 0 : index
    %52 = vector.load %arg7[%c0_51, %c0_52] : memref<24x128xf32, #tpu.memory_space<vmem>>, vector<8x128xf32>
    tpu.vector_store %arg7[%c0_51, %c0_52], %51 {strides = array<i32>} : memref<24x128xf32, #tpu.memory_space<vmem>>, vector<8x128xf32>,
    %53 = vector.extract_strided_slice %50 {offsets = [0, 128], sizes = [8, 128], strides = [1, 1]} : vector<8x384xf32> to vector<8x128xf32>
    %c8_53 = arith.constant 8 : index
    %c0_54 = arith.constant 0 : index
    %54 = vector.load %arg7[%c8_53, %c0_54] : memref<24x128xf32, #tpu.memory_space<vmem>>, vector<8x128xf32>
    tpu.vector_store %arg7[%c8_53, %c0_54], %53 {strides = array<i32>} : memref<24x128xf32, #tpu.memory_space<vmem>>, vector<8x128xf32>,
    %55 = vector.extract_strided_slice %50 {offsets = [0, 256], sizes = [8, 128], strides = [1, 1]} : vector<8x384xf32> to vector<8x128xf32>
    %c16_55 = arith.constant 16 : index
    %c0_56 = arith.constant 0 : index
    %56 = vector.load %arg7[%c16_55, %c0_56] : memref<24x128xf32, #tpu.memory_space<vmem>>, vector<8x128xf32>
    tpu.vector_store %arg7[%c16_55, %c0_56], %55 {strides = array<i32>} : memref<24x128xf32, #tpu.memory_space<vmem>>, vector<8x128xf32>,
    %c0_57 = arith.constant 0 : index
    %c0_58 = arith.constant 0 : index
    %57 = vector.load %arg7[%c0_57, %c0_58] : memref<24x128xf32, #tpu.memory_space<vmem>>, vector<24x128xf32>
    %cst_59 = arith.constant dense<0.000000e+00> : vector<16x128xf32>
    %58 = tpu.matmul %1, %57, %cst_59 {dimension_numbers = #tpu.dot_dimension_numbers<[1], [0], [0], [1], [0, 0, 1, 1], [], []>} : vector<16x24xf32>, vector<24x128xf32>, vector<16x128xf32> -> vector<16x128xf32>
    %59 = arith.addf %58, %2 : vector<16x128xf32>
    %c0_60 = arith.constant 0 : index
    %c0_61 = arith.constant 0 : index
    %c384_62 = arith.constant 384 : index
    %60 = vector.load %arg6[%c0_60, %c0_61, %c384_62] : memref<1x16x1024xf32, #tpu.memory_space<vmem>>, vector<1x16x128xf32>
    %61 = vector.shape_cast %60 : vector<1x16x128xf32> to vector<16x128xf32>
    %62 = vector.shape_cast %59 : vector<16x128xf32> to vector<1x16x128xf32>
    tpu.vector_store %arg6[%c0_60, %c0_61, %c384_62], %62 {strides = array<i32>} : memref<1x16x1024xf32, #tpu.memory_space<vmem>>, vector<1x16x128xf32>,
    %c0_63 = arith.constant 0 : index
    %c0_64 = arith.constant 0 : index
    %c512 = arith.constant 512 : index
    %63 = vector.load %arg2[%c0_63, %c0_64, %c512] : memref<1x8x1024xf32, #tpu.memory_space<vmem>>, vector<1x8x128xf32>
    %64 = vector.shape_cast %63 : vector<1x8x128xf32> to vector<8x128xf32>
    %cst_65 = arith.constant dense<0.000000e+00> : vector<8x384xf32>
    %65 = tpu.matmul %64, %0, %cst_65 {dimension_numbers = #tpu.dot_dimension_numbers<[1], [0], [0], [1], [0, 0, 1, 1], [], []>} : vector<8x128xf32>, vector<128x384xf32>, vector<8x384xf32> -> vector<8x384xf32>
    %66 = vector.extract_strided_slice %65 {offsets = [0, 0], sizes = [8, 128], strides = [1, 1]} : vector<8x384xf32> to vector<8x128xf32>
    %c0_66 = arith.constant 0 : index
    %c0_67 = arith.constant 0 : index
    %67 = vector.load %arg7[%c0_66, %c0_67] : memref<24x128xf32, #tpu.memory_space<vmem>>, vector<8x128xf32>
    tpu.vector_store %arg7[%c0_66, %c0_67], %66 {strides = array<i32>} : memref<24x128xf32, #tpu.memory_space<vmem>>, vector<8x128xf32>,
    %68 = vector.extract_strided_slice %65 {offsets = [0, 128], sizes = [8, 128], strides = [1, 1]} : vector<8x384xf32> to vector<8x128xf32>
    %c8_68 = arith.constant 8 : index
    %c0_69 = arith.constant 0 : index
    %69 = vector.load %arg7[%c8_68, %c0_69] : memref<24x128xf32, #tpu.memory_space<vmem>>, vector<8x128xf32>
    tpu.vector_store %arg7[%c8_68, %c0_69], %68 {strides = array<i32>} : memref<24x128xf32, #tpu.memory_space<vmem>>, vector<8x128xf32>,
    %70 = vector.extract_strided_slice %65 {offsets = [0, 256], sizes = [8, 128], strides = [1, 1]} : vector<8x384xf32> to vector<8x128xf32>
    %c16_70 = arith.constant 16 : index
    %c0_71 = arith.constant 0 : index
    %71 = vector.load %arg7[%c16_70, %c0_71] : memref<24x128xf32, #tpu.memory_space<vmem>>, vector<8x128xf32>
    tpu.vector_store %arg7[%c16_70, %c0_71], %70 {strides = array<i32>} : memref<24x128xf32, #tpu.memory_space<vmem>>, vector<8x128xf32>,
    %c0_72 = arith.constant 0 : index
    %c0_73 = arith.constant 0 : index
    %72 = vector.load %arg7[%c0_72, %c0_73] : memref<24x128xf32, #tpu.memory_space<vmem>>, vector<24x128xf32>
    %cst_74 = arith.constant dense<0.000000e+00> : vector<16x128xf32>
    %73 = tpu.matmul %1, %72, %cst_74 {dimension_numbers = #tpu.dot_dimension_numbers<[1], [0], [0], [1], [0, 0, 1, 1], [], []>} : vector<16x24xf32>, vector<24x128xf32>, vector<16x128xf32> -> vector<16x128xf32>
    %74 = arith.addf %73, %2 : vector<16x128xf32>
    %c0_75 = arith.constant 0 : index
    %c0_76 = arith.constant 0 : index
    %c512_77 = arith.constant 512 : index
    %75 = vector.load %arg6[%c0_75, %c0_76, %c512_77] : memref<1x16x1024xf32, #tpu.memory_space<vmem>>, vector<1x16x128xf32>
    %76 = vector.shape_cast %75 : vector<1x16x128xf32> to vector<16x128xf32>
    %77 = vector.shape_cast %74 : vector<16x128xf32> to vector<1x16x128xf32>
    tpu.vector_store %arg6[%c0_75, %c0_76, %c512_77], %77 {strides = array<i32>} : memref<1x16x1024xf32, #tpu.memory_space<vmem>>, vector<1x16x128xf32>,
    %c0_78 = arith.constant 0 : index
    %c0_79 = arith.constant 0 : index
    %c640 = arith.constant 640 : index
    %78 = vector.load %arg2[%c0_78, %c0_79, %c640] : memref<1x8x1024xf32, #tpu.memory_space<vmem>>, vector<1x8x128xf32>
    %79 = vector.shape_cast %78 : vector<1x8x128xf32> to vector<8x128xf32>
    %cst_80 = arith.constant dense<0.000000e+00> : vector<8x384xf32>
    %80 = tpu.matmul %79, %0, %cst_80 {dimension_numbers = #tpu.dot_dimension_numbers<[1], [0], [0], [1], [0, 0, 1, 1], [], []>} : vector<8x128xf32>, vector<128x384xf32>, vector<8x384xf32> -> vector<8x384xf32>
    %81 = vector.extract_strided_slice %80 {offsets = [0, 0], sizes = [8, 128], strides = [1, 1]} : vector<8x384xf32> to vector<8x128xf32>
    %c0_81 = arith.constant 0 : index
    %c0_82 = arith.constant 0 : index
    %82 = vector.load %arg7[%c0_81, %c0_82] : memref<24x128xf32, #tpu.memory_space<vmem>>, vector<8x128xf32>
    tpu.vector_store %arg7[%c0_81, %c0_82], %81 {strides = array<i32>} : memref<24x128xf32, #tpu.memory_space<vmem>>, vector<8x128xf32>,
    %83 = vector.extract_strided_slice %80 {offsets = [0, 128], sizes = [8, 128], strides = [1, 1]} : vector<8x384xf32> to vector<8x128xf32>
    %c8_83 = arith.constant 8 : index
    %c0_84 = arith.constant 0 : index
    %84 = vector.load %arg7[%c8_83, %c0_84] : memref<24x128xf32, #tpu.memory_space<vmem>>, vector<8x128xf32>
    tpu.vector_store %arg7[%c8_83, %c0_84], %83 {strides = array<i32>} : memref<24x128xf32, #tpu.memory_space<vmem>>, vector<8x128xf32>,
    %85 = vector.extract_strided_slice %80 {offsets = [0, 256], sizes = [8, 128], strides = [1, 1]} : vector<8x384xf32> to vector<8x128xf32>
    %c16_85 = arith.constant 16 : index
    %c0_86 = arith.constant 0 : index
    %86 = vector.load %arg7[%c16_85, %c0_86] : memref<24x128xf32, #tpu.memory_space<vmem>>, vector<8x128xf32>
    tpu.vector_store %arg7[%c16_85, %c0_86], %85 {strides = array<i32>} : memref<24x128xf32, #tpu.memory_space<vmem>>, vector<8x128xf32>,
    %c0_87 = arith.constant 0 : index
    %c0_88 = arith.constant 0 : index
    %87 = vector.load %arg7[%c0_87, %c0_88] : memref<24x128xf32, #tpu.memory_space<vmem>>, vector<24x128xf32>
    %cst_89 = arith.constant dense<0.000000e+00> : vector<16x128xf32>
    %88 = tpu.matmul %1, %87, %cst_89 {dimension_numbers = #tpu.dot_dimension_numbers<[1], [0], [0], [1], [0, 0, 1, 1], [], []>} : vector<16x24xf32>, vector<24x128xf32>, vector<16x128xf32> -> vector<16x128xf32>
    %89 = arith.addf %88, %2 : vector<16x128xf32>
    %c0_90 = arith.constant 0 : index
    %c0_91 = arith.constant 0 : index
    %c640_92 = arith.constant 640 : index
    %90 = vector.load %arg6[%c0_90, %c0_91, %c640_92] : memref<1x16x1024xf32, #tpu.memory_space<vmem>>, vector<1x16x128xf32>
    %91 = vector.shape_cast %90 : vector<1x16x128xf32> to vector<16x128xf32>
    %92 = vector.shape_cast %89 : vector<16x128xf32> to vector<1x16x128xf32>
    tpu.vector_store %arg6[%c0_90, %c0_91, %c640_92], %92 {strides = array<i32>} : memref<1x16x1024xf32, #tpu.memory_space<vmem>>, vector<1x16x128xf32>,
    %c0_93 = arith.constant 0 : index
    %c0_94 = arith.constant 0 : index
    %c768 = arith.constant 768 : index
    %93 = vector.load %arg2[%c0_93, %c0_94, %c768] : memref<1x8x1024xf32, #tpu.memory_space<vmem>>, vector<1x8x128xf32>
    %94 = vector.shape_cast %93 : vector<1x8x128xf32> to vector<8x128xf32>
    %cst_95 = arith.constant dense<0.000000e+00> : vector<8x384xf32>
    %95 = tpu.matmul %94, %0, %cst_95 {dimension_numbers = #tpu.dot_dimension_numbers<[1], [0], [0], [1], [0, 0, 1, 1], [], []>} : vector<8x128xf32>, vector<128x384xf32>, vector<8x384xf32> -> vector<8x384xf32>
    %96 = vector.extract_strided_slice %95 {offsets = [0, 0], sizes = [8, 128], strides = [1, 1]} : vector<8x384xf32> to vector<8x128xf32>
    %c0_96 = arith.constant 0 : index
    %c0_97 = arith.constant 0 : index
    %97 = vector.load %arg7[%c0_96, %c0_97] : memref<24x128xf32, #tpu.memory_space<vmem>>, vector<8x128xf32>
    tpu.vector_store %arg7[%c0_96, %c0_97], %96 {strides = array<i32>} : memref<24x128xf32, #tpu.memory_space<vmem>>, vector<8x128xf32>,
    %98 = vector.extract_strided_slice %95 {offsets = [0, 128], sizes = [8, 128], strides = [1, 1]} : vector<8x384xf32> to vector<8x128xf32>
    %c8_98 = arith.constant 8 : index
    %c0_99 = arith.constant 0 : index
    %99 = vector.load %arg7[%c8_98, %c0_99] : memref<24x128xf32, #tpu.memory_space<vmem>>, vector<8x128xf32>
    tpu.vector_store %arg7[%c8_98, %c0_99], %98 {strides = array<i32>} : memref<24x128xf32, #tpu.memory_space<vmem>>, vector<8x128xf32>,
    %100 = vector.extract_strided_slice %95 {offsets = [0, 256], sizes = [8, 128], strides = [1, 1]} : vector<8x384xf32> to vector<8x128xf32>
    %c16_100 = arith.constant 16 : index
    %c0_101 = arith.constant 0 : index
    %101 = vector.load %arg7[%c16_100, %c0_101] : memref<24x128xf32, #tpu.memory_space<vmem>>, vector<8x128xf32>
    tpu.vector_store %arg7[%c16_100, %c0_101], %100 {strides = array<i32>} : memref<24x128xf32, #tpu.memory_space<vmem>>, vector<8x128xf32>,
    %c0_102 = arith.constant 0 : index
    %c0_103 = arith.constant 0 : index
    %102 = vector.load %arg7[%c0_102, %c0_103] : memref<24x128xf32, #tpu.memory_space<vmem>>, vector<24x128xf32>
    %cst_104 = arith.constant dense<0.000000e+00> : vector<16x128xf32>
    %103 = tpu.matmul %1, %102, %cst_104 {dimension_numbers = #tpu.dot_dimension_numbers<[1], [0], [0], [1], [0, 0, 1, 1], [], []>} : vector<16x24xf32>, vector<24x128xf32>, vector<16x128xf32> -> vector<16x128xf32>
    %104 = arith.addf %103, %2 : vector<16x128xf32>
    %c0_105 = arith.constant 0 : index
    %c0_106 = arith.constant 0 : index
    %c768_107 = arith.constant 768 : index
    %105 = vector.load %arg6[%c0_105, %c0_106, %c768_107] : memref<1x16x1024xf32, #tpu.memory_space<vmem>>, vector<1x16x128xf32>
    %106 = vector.shape_cast %105 : vector<1x16x128xf32> to vector<16x128xf32>
    %107 = vector.shape_cast %104 : vector<16x128xf32> to vector<1x16x128xf32>
    tpu.vector_store %arg6[%c0_105, %c0_106, %c768_107], %107 {strides = array<i32>} : memref<1x16x1024xf32, #tpu.memory_space<vmem>>, vector<1x16x128xf32>,
    %c0_108 = arith.constant 0 : index
    %c0_109 = arith.constant 0 : index
    %c896 = arith.constant 896 : index
    %108 = vector.load %arg2[%c0_108, %c0_109, %c896] : memref<1x8x1024xf32, #tpu.memory_space<vmem>>, vector<1x8x128xf32>
    %109 = vector.shape_cast %108 : vector<1x8x128xf32> to vector<8x128xf32>
    %cst_110 = arith.constant dense<0.000000e+00> : vector<8x384xf32>
    %110 = tpu.matmul %109, %0, %cst_110 {dimension_numbers = #tpu.dot_dimension_numbers<[1], [0], [0], [1], [0, 0, 1, 1], [], []>} : vector<8x128xf32>, vector<128x384xf32>, vector<8x384xf32> -> vector<8x384xf32>
    %111 = vector.extract_strided_slice %110 {offsets = [0, 0], sizes = [8, 128], strides = [1, 1]} : vector<8x384xf32> to vector<8x128xf32>
    %c0_111 = arith.constant 0 : index
    %c0_112 = arith.constant 0 : index
    %112 = vector.load %arg7[%c0_111, %c0_112] : memref<24x128xf32, #tpu.memory_space<vmem>>, vector<8x128xf32>
    tpu.vector_store %arg7[%c0_111, %c0_112], %111 {strides = array<i32>} : memref<24x128xf32, #tpu.memory_space<vmem>>, vector<8x128xf32>,
    %113 = vector.extract_strided_slice %110 {offsets = [0, 128], sizes = [8, 128], strides = [1, 1]} : vector<8x384xf32> to vector<8x128xf32>
    %c8_113 = arith.constant 8 : index
    %c0_114 = arith.constant 0 : index
    %114 = vector.load %arg7[%c8_113, %c0_114] : memref<24x128xf32, #tpu.memory_space<vmem>>, vector<8x128xf32>
    tpu.vector_store %arg7[%c8_113, %c0_114], %113 {strides = array<i32>} : memref<24x128xf32, #tpu.memory_space<vmem>>, vector<8x128xf32>,
    %115 = vector.extract_strided_slice %110 {offsets = [0, 256], sizes = [8, 128], strides = [1, 1]} : vector<8x384xf32> to vector<8x128xf32>
    %c16_115 = arith.constant 16 : index
    %c0_116 = arith.constant 0 : index
    %116 = vector.load %arg7[%c16_115, %c0_116] : memref<24x128xf32, #tpu.memory_space<vmem>>, vector<8x128xf32>
    tpu.vector_store %arg7[%c16_115, %c0_116], %115 {strides = array<i32>} : memref<24x128xf32, #tpu.memory_space<vmem>>, vector<8x128xf32>,
    %c0_117 = arith.constant 0 : index
    %c0_118 = arith.constant 0 : index
    %117 = vector.load %arg7[%c0_117, %c0_118] : memref<24x128xf32, #tpu.memory_space<vmem>>, vector<24x128xf32>
    %cst_119 = arith.constant dense<0.000000e+00> : vector<16x128xf32>
    %118 = tpu.matmul %1, %117, %cst_119 {dimension_numbers = #tpu.dot_dimension_numbers<[1], [0], [0], [1], [0, 0, 1, 1], [], []>} : vector<16x24xf32>, vector<24x128xf32>, vector<16x128xf32> -> vector<16x128xf32>
    %119 = arith.addf %118, %2 : vector<16x128xf32>
    %c0_120 = arith.constant 0 : index
    %c0_121 = arith.constant 0 : index
    %c896_122 = arith.constant 896 : index
    %120 = vector.load %arg6[%c0_120, %c0_121, %c896_122] : memref<1x16x1024xf32, #tpu.memory_space<vmem>>, vector<1x16x128xf32>
    %121 = vector.shape_cast %120 : vector<1x16x128xf32> to vector<16x128xf32>
    %122 = vector.shape_cast %119 : vector<16x128xf32> to vector<1x16x128xf32>
    tpu.vector_store %arg6[%c0_120, %c0_121, %c896_122], %122 {strides = array<i32>} : memref<1x16x1024xf32, #tpu.memory_space<vmem>>, vector<1x16x128xf32>,
    return
  }
  func.func @transform_0(%arg0: i32, %arg1: i32) -> (i32, i32, i32) {
    %c0_i32 = arith.constant 0 : i32
    %c0_i32_0 = arith.constant 0 : i32
    return %arg0, %c0_i32, %arg1 : i32, i32, i32
  }
  func.func @transform_1(%arg0: i32, %arg1: i32) -> (i32, i32) {
    %c0_i32 = arith.constant 0 : i32
    %c0_i32_0 = arith.constant 0 : i32
    %c0_i32_1 = arith.constant 0 : i32
    return %c0_i32, %c0_i32_0 : i32, i32
  }
  func.func @transform_2(%arg0: i32, %arg1: i32) -> (i32, i32) {
    %c0_i32 = arith.constant 0 : i32
    %c0_i32_0 = arith.constant 0 : i32
    %c0_i32_1 = arith.constant 0 : i32
    return %c0_i32, %c0_i32_0 : i32, i32
  }
  func.func @transform_3(%arg0: i32, %arg1: i32) -> (i32, i32) {
    %c0_i32 = arith.constant 0 : i32
    %c0_i32_0 = arith.constant 0 : i32
    %c0_i32_1 = arith.constant 0 : i32
    return %c0_i32, %c0_i32_0 : i32, i32
  }
  func.func @transform_4(%arg0: i32, %arg1: i32) -> (i32, i32, i32) {
    %c0_i32 = arith.constant 0 : i32
    %c0_i32_0 = arith.constant 0 : i32
    return %arg0, %c0_i32, %arg1 : i32, i32, i32
  }
}

</mosaic_0001>

<llo_original>
// kernel: tpu_custom_call.1
$region0: #{tpu_custom_call.1}
  #allocation0 [shape = 'u32[]', space=smem, size = 0x4, offset = 0x4, fixed_abs, tag = 'smem constant byte address 0x4 - core index']
  #allocation1 [shape = 'u32[72,128]{1,0:T(1,128)}', space=vmem, size = 0x9000, scoped, tag = 'internal scratch']
  #allocation2 [shape = 'f32[24,128]{1,0:T(8,128)}', space=vmem, size = 0x3000, scoped, tag = 'scratch operand']
  %s0 = inlined_call_operand.hbm [shape: f32[2,8,1024], index: 0, kind: input, shape index: {}]
  %s1 = inlined_call_operand.hbm [shape: f32[128,384], index: 1, kind: input, shape index: {}]
  %s2 = inlined_call_operand.hbm [shape: f32[16,24], index: 2, kind: input, shape index: {}]
  %s3 = inlined_call_operand.hbm [shape: f32[16,128], index: 3, kind: input, shape index: {}]
  %s4 = inlined_call_operand.hbm [shape: f32[2,16,1024], index: 4, kind: output, shape index: {}]
  %s5 = sld [smem:[#allocation0]]
  $region65: #{tpu_custom_call.1} parent=0
    _
  %s7 = ssub.s32 1, %s5
  %s8 = scalar_select 0, %s7, %s5
  $region1: #{tpu_custom_call.1} parent=0
    #allocation3 [shape = 'u8[65536]{0}', space=vmem, size = 0x10000, scoped, tag = 'input window, operand 0']
    #allocation4 [shape = 's32[2]{0}', space=sflag, size = 0x8, scoped, tag = 'scoped memory for tpu_custom_call.1']
    #allocation5 [shape = 's32[2]{0}', space=sflag, size = 0x8, scoped, tag = 'scoped memory for tpu_custom_call.1']
    #allocation6 [shape = 'u8[196608]{0}', space=vmem, size = 0x30000, scoped, tag = 'input window, operand 1, single buffered']
    #allocation7 [shape = 's32[1]{0}', space=sflag, size = 0x4, scoped, tag = 'scoped memory for tpu_custom_call.1']
    #allocation8 [shape = 'u8[8192]{0}', space=vmem, size = 0x2000, scoped, tag = 'input window, operand 2, single buffered']
    #allocation9 [shape = 'u8[8192]{0}', space=vmem, size = 0x2000, scoped, tag = 'input window, operand 3, single buffered']
    #allocation10 [shape = 's32[1]{0}', space=sflag, size = 0x4, scoped, tag = 'scoped memory for tpu_custom_call.1']
    #allocation11 [shape = 'u8[131072]{0}', space=vmem, size = 0x20000, scoped, tag = 'output window, operand 0']
    %9 = vsyncpa [#allocation4], 0
    %s10 = scalar_lea.sflag [#allocation4], 1
    %11 = vsyncpa %s10, 0
    %12 = vsyncpa [#allocation7], 0
    %13 = vsyncpa [#allocation10], 0
    %14 = vsyncpa [#allocation5], 0
    %s15 = scalar_lea.sflag [#allocation5], 1
    %16 = vsyncpa %s15, 0
    loop: start=0, step=1, limit=4
    $region2: #{tpu_custom_call.1} parent=1 // loop_pre_header
      _
    $region3: #{tpu_custom_call.1} parent=1 // loop_header
      %s18 = sphi 0, %s22
      %p19 = scmp.ge.s32.totalorder %s18, 4
      %s25 = sphi 0, %s37
      %s26 = sphi 0, %s33
      %s27 = sphi 0, %s25
      %s28 = sphi 0, %s26
      %s29 = sphi 0, %s27
      %s30 = sphi 0, %s28
      %s42 = sphi 0, %s44
      %s45 = sphi 0, %s42
      %s46 = sphi 0, %s45
      %s62 = sphi 0, %s46
      %s66 = sphi 0, %s66
      %s68 = sphi 0, %s66
      %s69 = sphi 0, %s68
      %s83 = sphi 0, %s69
      %s87 = sphi 0, %s87
      %s89 = sphi 0, %s87
      %s90 = sphi 0, %s89
      %s104 = sphi 0, %s90
      %s108 = sphi 0, %s108
      %s110 = sphi 0, %s108
      %s111 = sphi 0, %s110
      %s125 = sphi 0, %s111
      %s133 = sphi 0, %s135
      %s136 = sphi 0, %s133
      %s137 = sphi 0, %s136
      %s153 = sphi 0, %s137
    $region4: #{tpu_custom_call.1} parent=1 // loop_header_branch
      %21 = sbr.rel (%p19) target = $region8
    $region5: #{tpu_custom_call.1} parent=1 // loop_body
      %s23 = ssub.s32 %s18, 1
      %s24 = ssub.s32 %s18, 2
      %s31 = sadd.s32 1, %s26
      %p32 = scmp.ge.s32.totalorder %s31, 1
      %s33 = scalar_select %p32, 0, %s31
      %s34 = sadd.s32 1, %s25
      %s35 = scalar_select %p32, %s34, %s25
      %p36 = scmp.ge.s32.totalorder %s35, 2
      %s37 = scalar_select %p36, 0, %s35
      %s38 = ssub.s32 %s25, %s37
      %s39 = ssub.s32 %s26, %s33
      %s40 = sor.u32 %s38, %s39
      %p41 = scmp.eq.s32.totalorder %s40, 0
      %s43 = sadd.s32 %s42, 1
      %s44 = scalar_select %p41, %s42, %s43
      %p47 = pneg %p41
      %p48 = scmp.eq.s32.totalorder %s18, 1
      %p49 = por %p47, %p48
      %p50 = scmp.ne.s32.totalorder %s42, %s45
      %p51 = scmp.eq.s32.totalorder %s18, 0
      %p52 = por %p50, %p51
      %p53 = scmp.ne.s32.totalorder %s42, %s45
      %p54 = scmp.eq.s32.totalorder %s23, 1
      %p55 = por %p53, %p54
      %p56 = scmp.ne.s32.totalorder %s45, %s46
      %p57 = scmp.eq.s32.totalorder %s23, 0
      %p58 = por %p56, %p57
      %p59 = scmp.ne.s32.totalorder %s45, %s46
      %p60 = scmp.eq.s32.totalorder %s24, 1
      %p61 = por %p59, %p60
      %p63 = scmp.ne.s32.totalorder %s46, %s62
      %p64 = scmp.eq.s32.totalorder %s24, 0
      %p65 = por %p63, %p64
      %s67 = sadd.s32 %s66, 1
      %p70 = scmp.eq.s32.totalorder %s18, 1
      %p71 = scmp.ne.s32.totalorder %s66, %s68
      %p72 = scmp.eq.s32.totalorder %s18, 0
      %p73 = por %p71, %p72
      %p74 = scmp.ne.s32.totalorder %s66, %s68
      %p75 = scmp.eq.s32.totalorder %s23, 1
      %p76 = por %p74, %p75
      %p77 = scmp.ne.s32.totalorder %s68, %s69
      %p78 = scmp.eq.s32.totalorder %s23, 0
      %p79 = por %p77, %p78
      %p80 = scmp.ne.s32.totalorder %s68, %s69
      %p81 = scmp.eq.s32.totalorder %s24, 1
      %p82 = por %p80, %p81
      %p84 = scmp.ne.s32.totalorder %s69, %s83
      %p85 = scmp.eq.s32.totalorder %s24, 0
      %p86 = por %p84, %p85
      %s88 = sadd.s32 %s87, 1
      %p91 = scmp.eq.s32.totalorder %s18, 1
      %p92 = scmp.ne.s32.totalorder %s87, %s89
      %p93 = scmp.eq.s32.totalorder %s18, 0
      %p94 = por %p92, %p93
      %p95 = scmp.ne.s32.totalorder %s87, %s89
      %p96 = scmp.eq.s32.totalorder %s23, 1
      %p97 = por %p95, %p96
      %p98 = scmp.ne.s32.totalorder %s89, %s90
      %p99 = scmp.eq.s32.totalorder %s23, 0
      %p100 = por %p98, %p99
      %p101 = scmp.ne.s32.totalorder %s89, %s90
      %p102 = scmp.eq.s32.totalorder %s24, 1
      %p103 = por %p101, %p102
      %p105 = scmp.ne.s32.totalorder %s90, %s104
      %p106 = scmp.eq.s32.totalorder %s24, 0
      %p107 = por %p105, %p106
      %s109 = sadd.s32 %s108, 1
      %p112 = scmp.eq.s32.totalorder %s18, 1
      %p113 = scmp.ne.s32.totalorder %s108, %s110
      %p114 = scmp.eq.s32.totalorder %s18, 0
      %p115 = por %p113, %p114
      %p116 = scmp.ne.s32.totalorder %s108, %s110
      %p117 = scmp.eq.s32.totalorder %s23, 1
      %p118 = por %p116, %p117
      %p119 = scmp.ne.s32.totalorder %s110, %s111
      %p120 = scmp.eq.s32.totalorder %s23, 0
      %p121 = por %p119, %p120
      %p122 = scmp.ne.s32.totalorder %s110, %s111
      %p123 = scmp.eq.s32.totalorder %s24, 1
      %p124 = por %p122, %p123
      %p126 = scmp.ne.s32.totalorder %s111, %s125
      %p127 = scmp.eq.s32.totalorder %s24, 0
      %p128 = por %p126, %p127
      %s129 = ssub.s32 %s25, %s37
      %s130 = ssub.s32 %s26, %s33
      %s131 = sor.u32 %s129, %s130
      %p132 = scmp.eq.s32.totalorder %s131, 0
      %s134 = sadd.s32 %s133, 1
      %s135 = scalar_select %p132, %s133, %s134
      %p138 = pneg %p132
      %p139 = scmp.eq.s32.totalorder %s18, 1
      %p140 = por %p138, %p139
      %p141 = scmp.ne.s32.totalorder %s133, %s136
      %p142 = scmp.eq.s32.totalorder %s18, 0
      %p143 = por %p141, %p142
      %p144 = scmp.ne.s32.totalorder %s133, %s136
      %p145 = scmp.eq.s32.totalorder %s23, 1
      %p146 = por %p144, %p145
      %p147 = scmp.ne.s32.totalorder %s136, %s137
      %p148 = scmp.eq.s32.totalorder %s23, 0
      %p149 = por %p147, %p148
      %p150 = scmp.ne.s32.totalorder %s136, %s137
      %p151 = scmp.eq.s32.totalorder %s24, 1
      %p152 = por %p150, %p151
      %p154 = scmp.ne.s32.totalorder %s137, %s153
      %p155 = scmp.eq.s32.totalorder %s24, 0
      %p156 = por %p154, %p155
      %p157 = scmp.le.s32.totalorder 1, %s18
      %p158 = scmp.lt.s32.totalorder %s18, 3
      %p159 = pnand %p157, %p158
      %p160 = pneg %p159
      // Predicated region
      $region9: #{tpu_custom_call.1} parent=5 // pred_check
        _
      $region10: #{tpu_custom_call.1} parent=5 // pred_check_branch
        %162 = sbr.rel (%p159) target = $region12
      $region11: #{tpu_custom_call.1} parent=5 // pred_region
        %s163 = ssub.s32 %s18, 1
        // Predicated region
        $region13: #{tpu_custom_call.1} parent=11 // pred_check
          %p164 = pneg %p79
        $region14: #{tpu_custom_call.1} parent=11 // pred_check_branch
          %166 = sbr.rel (%p164) target = $region16
        $region15: #{tpu_custom_call.1} parent=11 // pred_region
          %168 = vsyncadd [#allocation7], 0
          %s169 = sshll.u32 %s1, 4
          %s170 = int_to_ptr.hbm [resolvable:$true] %s169
          %s171 = sshll.u32 [#allocation6], 4
          %s172 = int_to_ptr.vmem [resolvable:$true] %s171
          %177 = dma.hbm_to_vmem [thread:$0]  %s170, 6144, %s172, [#allocation7], 384, 384, 24
        $region16: #{tpu_custom_call.1} parent=11 // pred_fallthru
          _
        // Predicated region
        $region17: #{tpu_custom_call.1} parent=11 // pred_check
          %p178 = pneg %p100
        $region18: #{tpu_custom_call.1} parent=11 // pred_check_branch
          %180 = sbr.rel (%p178) target = $region20
        $region19: #{tpu_custom_call.1} parent=11 // pred_region
          %182 = vsyncadd [#allocation7], 0
          %s183 = sshll.u32 %s2, 4
          %s184 = int_to_ptr.hbm [resolvable:$true] %s183
          %s185 = sshll.u32 [#allocation8], 4
          %s186 = int_to_ptr.vmem [resolvable:$true] %s185
          %191 = dma.hbm_to_vmem [thread:$0]  %s184, 256, %s186, [#allocation7], 128, 128, 8
        $region20: #{tpu_custom_call.1} parent=11 // pred_fallthru
          _
        // Predicated region
        $region21: #{tpu_custom_call.1} parent=11 // pred_check
          %p192 = pneg %p121
        $region22: #{tpu_custom_call.1} parent=11 // pred_check_branch
          %194 = sbr.rel (%p192) target = $region24
        $region23: #{tpu_custom_call.1} parent=11 // pred_region
          %196 = vsyncadd [#allocation10], 0
          %s197 = sshll.u32 %s3, 4
          %s198 = int_to_ptr.hbm [resolvable:$true] %s197
          %s199 = sshll.u32 [#allocation9], 4
          %s200 = int_to_ptr.vmem [resolvable:$true] %s199
          %205 = dma.hbm_to_vmem [thread:$0]  %s198, 256, %s200, [#allocation10], 128, 128, 8
        $region24: #{tpu_custom_call.1} parent=11 // pred_fallthru
          _
      $region12: #{tpu_custom_call.1} parent=5 // pred_fallthru
        _
      %p206 = scmp.lt.s32.totalorder %s18, 2
      // Predicated region
      $region25: #{tpu_custom_call.1} parent=5 // pred_check
        %p207 = pneg %p206
      $region26: #{tpu_custom_call.1} parent=5 // pred_check_branch
        %209 = sbr.rel (%p207) target = $region28
      $region27: #{tpu_custom_call.1} parent=5 // pred_region
        // Predicated region
        $region29: #{tpu_custom_call.1} parent=27 // pred_check
          %p210 = pneg %p52
        $region30: #{tpu_custom_call.1} parent=27 // pred_check_branch
          %212 = sbr.rel (%p210) target = $region32
        $region31: #{tpu_custom_call.1} parent=27 // pred_region
          %s213 = sand.u32 %s42, 1
          %s214 = scalar_lea.sflag [#allocation4], %s213
          %s215 = sand.u32 %s42, 1
          %s216 = smul.addr %s215, 64
          %s217 = scalar_lea.vmem [#allocation3], %s216
          %s218 = smul.u32 8, %s26
          %220 = vsyncadd %s214, 0
          %s221 = smul.addr %s25, 8
          %s222 = sadd.s32 %s218, %s221
          %s223 = smul.addr %s222, 8
          %s224 = scalar_lea.hbm %s0, %s223
          %s226 = sshll.u32 %s224, 4
          %s227 = int_to_ptr.hbm [resolvable:$true] %s226
          %s228 = sshll.u32 %s217, 4
          %s229 = int_to_ptr.vmem [resolvable:$true] %s228
          %231 = dma.hbm_to_vmem [thread:$0]  %s227, 1024, %s229, %s214
        $region32: #{tpu_custom_call.1} parent=27 // pred_fallthru
          _
      $region28: #{tpu_custom_call.1} parent=5 // pred_fallthru
        _
      %p232 = scmp.le.s32.totalorder 1, %s18
      %p233 = scmp.lt.s32.totalorder %s18, 3
      %p234 = pnand %p232, %p233
      %p235 = pneg %p234
      // Predicated region
      $region33: #{tpu_custom_call.1} parent=5 // pred_check
        _
      $region34: #{tpu_custom_call.1} parent=5 // pred_check_branch
        %237 = sbr.rel (%p234) target = $region36
      $region35: #{tpu_custom_call.1} parent=5 // pred_region
        %s238 = ssub.s32 %s18, 1
        %s239 = sand.u32 %s45, 1
        %s240 = scalar_lea.sflag [#allocation4], %s239
        %s241 = sand.u32 %s45, 1
        %s242 = smul.addr %s241, 64
        %s243 = scalar_lea.vmem [#allocation3], %s242
        // Predicated region
        $region37: #{tpu_custom_call.1} parent=35 // pred_check
          %p244 = pneg %p58
        $region38: #{tpu_custom_call.1} parent=35 // pred_check_branch
          %246 = sbr.rel (%p244) target = $region40
        $region39: #{tpu_custom_call.1} parent=35 // pred_region
          %248 = dma.done %s240, 1024
        $region40: #{tpu_custom_call.1} parent=35 // pred_fallthru
          _
        // Predicated region
        $region41: #{tpu_custom_call.1} parent=35 // pred_check
          %p249 = pneg %p79
        $region42: #{tpu_custom_call.1} parent=35 // pred_check_branch
          %251 = sbr.rel (%p249) target = $region44
        $region43: #{tpu_custom_call.1} parent=35 // pred_region
          %253 = dma.done [#allocation7], 6144
        $region44: #{tpu_custom_call.1} parent=35 // pred_fallthru
          _
        // Predicated region
        $region45: #{tpu_custom_call.1} parent=35 // pred_check
          %p254 = pneg %p100
        $region46: #{tpu_custom_call.1} parent=35 // pred_check_branch
          %256 = sbr.rel (%p254) target = $region48
        $region47: #{tpu_custom_call.1} parent=35 // pred_region
          %258 = dma.done [#allocation7], 256
        $region48: #{tpu_custom_call.1} parent=35 // pred_fallthru
          _
        // Predicated region
        $region49: #{tpu_custom_call.1} parent=35 // pred_check
          %p259 = pneg %p121
        $region50: #{tpu_custom_call.1} parent=35 // pred_check_branch
          %261 = sbr.rel (%p259) target = $region52
        $region51: #{tpu_custom_call.1} parent=35 // pred_region
          %263 = dma.done [#allocation10], 256
        $region52: #{tpu_custom_call.1} parent=35 // pred_fallthru
          _
        %s264 = sand.u32 %s45, 1
        %s265 = scalar_lea.sflag [#allocation4], %s264
        %s266 = sand.u32 %s45, 1
        %s267 = smul.addr %s266, 64
        %s268 = scalar_lea.vmem [#allocation3], %s267
        %p269 = pneg %p58
        %p270 = pneg %p55
        %p271 = pneg %p79
        %p272 = pneg %p76
        %p273 = pneg %p100
        %p274 = pneg %p97
        %p275 = pneg %p121
        %p276 = pneg %p118
        %p277 = pneg %p149
        %p278 = pneg %p146
        %s279 = sand.u32 %s136, 1
        %s280 = scalar_lea.sflag [#allocation5], %s279
        %s281 = sand.u32 %s136, 1
        %s282 = smul.addr %s281, 128
        %s283 = scalar_lea.vmem [#allocation11], %s282
        %s284 = smul.u32 8, %s28
        %s285 = smul.u32 8, %s28
        %v286 = vld [vmem:[#allocation6] sm:$0xff]
        %v287 = vld [vmem:[#allocation6 + $0x8] sm:$0xff]
        %v288 = vld [vmem:[#allocation6 + $0x10] sm:$0xff]
        %v289 = vld [vmem:[#allocation6 + $0x18] sm:$0xff]
        %v290 = vld [vmem:[#allocation6 + $0x20] sm:$0xff]
        %v291 = vld [vmem:[#allocation6 + $0x28] sm:$0xff]
        %v292 = vld [vmem:[#allocation6 + $0x30] sm:$0xff]
        %v293 = vld [vmem:[#allocation6 + $0x38] sm:$0xff]
        %v294 = vld [vmem:[#allocation6 + $0x40] sm:$0xff]
        %v295 = vld [vmem:[#allocation6 + $0x48] sm:$0xff]
        %v296 = vld [vmem:[#allocation6 + $0x50] sm:$0xff]
        %v297 = vld [vmem:[#allocation6 + $0x58] sm:$0xff]
        %v298 = vld [vmem:[#allocation6 + $0x60] sm:$0xff]
        %v299 = vld [vmem:[#allocation6 + $0x68] sm:$0xff]
        %v300 = vld [vmem:[#allocation6 + $0x70] sm:$0xff]
        %v301 = vld [vmem:[#allocation6 + $0x78] sm:$0xff]
        %v302 = vld [vmem:[#allocation6 + $0x80] sm:$0xff]
        %v303 = vld [vmem:[#allocation6 + $0x88] sm:$0xff]
        %v304 = vld [vmem:[#allocation6 + $0x90] sm:$0xff]
        %v305 = vld [vmem:[#allocation6 + $0x98] sm:$0xff]
        %v306 = vld [vmem:[#allocation6 + $0xa0] sm:$0xff]
        %v307 = vld [vmem:[#allocation6 + $0xa8] sm:$0xff]
        %v308 = vld [vmem:[#allocation6 + $0xb0] sm:$0xff]
        %v309 = vld [vmem:[#allocation6 + $0xb8] sm:$0xff]
        %v310 = vld [vmem:[#allocation6 + $0xc0] sm:$0xff]
        %v311 = vld [vmem:[#allocation6 + $0xc8] sm:$0xff]
        %v312 = vld [vmem:[#allocation6 + $0xd0] sm:$0xff]
        %v313 = vld [vmem:[#allocation6 + $0xd8] sm:$0xff]
        %v314 = vld [vmem:[#allocation6 + $0xe0] sm:$0xff]
        %v315 = vld [vmem:[#allocation6 + $0xe8] sm:$0xff]
        %v316 = vld [vmem:[#allocation6 + $0xf0] sm:$0xff]
        %v317 = vld [vmem:[#allocation6 + $0xf8] sm:$0xff]
        %v318 = vld [vmem:[#allocation6 + $0x100] sm:$0xff]
        %v319 = vld [vmem:[#allocation6 + $0x108] sm:$0xff]
        %v320 = vld [vmem:[#allocation6 + $0x110] sm:$0xff]
        %v321 = vld [vmem:[#allocation6 + $0x118] sm:$0xff]
        %v322 = vld [vmem:[#allocation6 + $0x120] sm:$0xff]
        %v323 = vld [vmem:[#allocation6 + $0x128] sm:$0xff]
        %v324 = vld [vmem:[#allocation6 + $0x130] sm:$0xff]
        %v325 = vld [vmem:[#allocation6 + $0x138] sm:$0xff]
        %v326 = vld [vmem:[#allocation6 + $0x140] sm:$0xff]
        %v327 = vld [vmem:[#allocation6 + $0x148] sm:$0xff]
        %v328 = vld [vmem:[#allocation6 + $0x150] sm:$0xff]
        %v329 = vld [vmem:[#allocation6 + $0x158] sm:$0xff]
        %v330 = vld [vmem:[#allocation6 + $0x160] sm:$0xff]
        %v331 = vld [vmem:[#allocation6 + $0x168] sm:$0xff]
        %v332 = vld [vmem:[#allocation6 + $0x170] sm:$0xff]
        %v333 = vld [vmem:[#allocation6 + $0x178] sm:$0xff]
        %v334 = vld [vmem:[#allocation8] sm:$0xff]
        %v335 = vld [vmem:[#allocation8 + $0x8] sm:$0xff]
        %v336 = vld [vmem:[#allocation9] sm:$0xff]
        %v337 = vld [vmem:[#allocation9 + $0x8] sm:$0xff]
        %v338 = vld [vmem:[%s243] sm:$0xff]
        %339 = vmatpush.msra.mxu0 %v331
        %340 = vmatpush.msra.mxu0 %v328
        %341 = vmatpush.msra.mxu0 %v325
        %342 = vmatpush.msra.mxu0 %v322
        %343 = vmatpush.msra.mxu0 %v319
        %344 = vmatpush.msra.mxu0 %v316
        %345 = vmatpush.msra.mxu0 %v313
        %346 = vmatpush.msra.mxu0 %v310
        %347 = vmatpush.msra.mxu0 %v307
        %348 = vmatpush.msra.mxu0 %v304
        %349 = vmatpush.msra.mxu0 %v301
        %350 = vmatpush.msra.mxu0 %v298
        %351 = vmatpush.msra.mxu0 %v295
        %352 = vmatpush.msra.mxu0 %v292
        %353 = vmatpush.msra.mxu0 %v289
        %354 = vmatpush.msra.mxu0 %v286
        %355 = vmatmul.f32.gmra.mxu0 %v338
        %v356 = vpop.f32.mrf.mxu0
        %v357 = vadd.f32 0.0, %v356
        %358 = vdwg.mxu0
        %359 = vmatpush.msra.mxu0 %v332
        %360 = vmatpush.msra.mxu0 %v329
        %361 = vmatpush.msra.mxu0 %v326
        %362 = vmatpush.msra.mxu0 %v323
        %363 = vmatpush.msra.mxu0 %v320
        %364 = vmatpush.msra.mxu0 %v317
        %365 = vmatpush.msra.mxu0 %v314
        %366 = vmatpush.msra.mxu0 %v311
        %367 = vmatpush.msra.mxu0 %v308
        %368 = vmatpush.msra.mxu0 %v305
        %369 = vmatpush.msra.mxu0 %v302
        %370 = vmatpush.msra.mxu0 %v299
        %371 = vmatpush.msra.mxu0 %v296
        %372 = vmatpush.msra.mxu0 %v293
        %373 = vmatpush.msra.mxu0 %v290
        %374 = vmatpush.msra.mxu0 %v287
        %375 = vmatmul.f32.gmra.mxu0 %v338
        %v376 = vpop.f32.mrf.mxu0
        %v377 = vadd.f32 0.0, %v376
        %378 = vdwg.mxu0
        %379 = vmatpush.msra.mxu0 %v333
        %380 = vmatpush.msra.mxu0 %v330
        %381 = vmatpush.msra.mxu0 %v327
        %382 = vmatpush.msra.mxu0 %v324
        %383 = vmatpush.msra.mxu0 %v321
        %384 = vmatpush.msra.mxu0 %v318
        %385 = vmatpush.msra.mxu0 %v315
        %386 = vmatpush.msra.mxu0 %v312
        %387 = vmatpush.msra.mxu0 %v309
        %388 = vmatpush.msra.mxu0 %v306
        %389 = vmatpush.msra.mxu0 %v303
        %390 = vmatpush.msra.mxu0 %v300
        %391 = vmatpush.msra.mxu0 %v297
        %392 = vmatpush.msra.mxu0 %v294
        %393 = vmatpush.msra.mxu0 %v291
        %394 = vmatpush.msra.mxu0 %v288
        %395 = vmatmul.f32.gmra.mxu0 %v338
        %v396 = vpop.f32.mrf.mxu0
        %v397 = vadd.f32 0.0, %v396
        %398 = vdwg.mxu0
        %399 = vst [vmem:[#allocation2] sm:$0xff] %v357
        %400 = vst [vmem:[#allocation2 + $0x8] sm:$0xff] %v377
        %401 = vst [vmem:[#allocation2 + $0x10] sm:$0xff] %v397
        %v402 = vld [vmem:[#allocation2] sm:$0xff]
        %v403 = vld [vmem:[#allocation2 + $0x8] sm:$0xff]
        %v404 = vld [vmem:[#allocation2 + $0x10] sm:$0xff]
        %vm405 = vcmask 195584
        %v407 = vsel %vm405, %v334, 0
        %v410 = vsel %vm405, %v335, 0
        %412 = vmatpush.msra.mxu0 0.0
        %413 = vmatpush.msra.mxu0 0.0
        %414 = vmatpush.msra.mxu0 0.0
        %415 = vmatpush.msra.mxu0 0.0
        %416 = vmatpush.msra.mxu0 0.0
        %417 = vmatpush.msra.mxu0 0.0
        %418 = vmatpush.msra.mxu0 0.0
        %419 = vmatpush.msra.mxu0 0.0
        %420 = vmatpush.msra.mxu0 0.0
        %421 = vmatpush.msra.mxu0 0.0
        %422 = vmatpush.msra.mxu0 0.0
        %423 = vmatpush.msra.mxu0 0.0
        %424 = vmatpush.msra.mxu0 0.0
        %425 = vmatpush.msra.mxu0 %v404
        %426 = vmatpush.msra.mxu0 %v403
        %427 = vmatpush.msra.mxu0 %v402
        %428 = vmatmul.f32.gmra.mxu0 %v407
        %v429 = vpop.f32.mrf.mxu0
        %v430 = vadd.f32 %v336, %v429
        %431 = vmatmul.f32.gmra.mxu0 %v410
        %v432 = vpop.f32.mrf.mxu0
        %v433 = vadd.f32 %v337, %v432
        %434 = vdwg.mxu0
        %435 = vst [vmem:[%s283] sm:$0xff] %v430
        %436 = vst [vmem:[%s283 + $0x40] sm:$0xff] %v433
        %v437 = vld [vmem:[%s243 + $0x8] sm:$0xff]
        %438 = vmatpush.msra.mxu0 %v331
        %439 = vmatpush.msra.mxu0 %v328
        %440 = vmatpush.msra.mxu0 %v325
        %441 = vmatpush.msra.mxu0 %v322
        %442 = vmatpush.msra.mxu0 %v319
        %443 = vmatpush.msra.mxu0 %v316
        %444 = vmatpush.msra.mxu0 %v313
        %445 = vmatpush.msra.mxu0 %v310
        %446 = vmatpush.msra.mxu0 %v307
        %447 = vmatpush.msra.mxu0 %v304
        %448 = vmatpush.msra.mxu0 %v301
        %449 = vmatpush.msra.mxu0 %v298
        %450 = vmatpush.msra.mxu0 %v295
        %451 = vmatpush.msra.mxu0 %v292
        %452 = vmatpush.msra.mxu0 %v289
        %453 = vmatpush.msra.mxu0 %v286
        %454 = vmatmul.f32.gmra.mxu0 %v437
        %v455 = vpop.f32.mrf.mxu0
        %v456 = vadd.f32 0.0, %v455
        %457 = vdwg.mxu0
        %458 = vmatpush.msra.mxu0 %v332
        %459 = vmatpush.msra.mxu0 %v329
        %460 = vmatpush.msra.mxu0 %v326
        %461 = vmatpush.msra.mxu0 %v323
        %462 = vmatpush.msra.mxu0 %v320
        %463 = vmatpush.msra.mxu0 %v317
        %464 = vmatpush.msra.mxu0 %v314
        %465 = vmatpush.msra.mxu0 %v311
        %466 = vmatpush.msra.mxu0 %v308
        %467 = vmatpush.msra.mxu0 %v305
        %468 = vmatpush.msra.mxu0 %v302
        %469 = vmatpush.msra.mxu0 %v299
        %470 = vmatpush.msra.mxu0 %v296
        %471 = vmatpush.msra.mxu0 %v293
        %472 = vmatpush.msra.mxu0 %v290
        %473 = vmatpush.msra.mxu0 %v287
        %474 = vmatmul.f32.gmra.mxu0 %v437
        %v475 = vpop.f32.mrf.mxu0
        %v476 = vadd.f32 0.0, %v475
        %477 = vdwg.mxu0
        %478 = vmatpush.msra.mxu0 %v333
        %479 = vmatpush.msra.mxu0 %v330
        %480 = vmatpush.msra.mxu0 %v327
        %481 = vmatpush.msra.mxu0 %v324
        %482 = vmatpush.msra.mxu0 %v321
        %483 = vmatpush.msra.mxu0 %v318
        %484 = vmatpush.msra.mxu0 %v315
        %485 = vmatpush.msra.mxu0 %v312
        %486 = vmatpush.msra.mxu0 %v309
        %487 = vmatpush.msra.mxu0 %v306
        %488 = vmatpush.msra.mxu0 %v303
        %489 = vmatpush.msra.mxu0 %v300
        %490 = vmatpush.msra.mxu0 %v297
        %491 = vmatpush.msra.mxu0 %v294
        %492 = vmatpush.msra.mxu0 %v291
        %493 = vmatpush.msra.mxu0 %v288
        %494 = vmatmul.f32.gmra.mxu0 %v437
        %v495 = vpop.f32.mrf.mxu0
        %v496 = vadd.f32 0.0, %v495
        %497 = vdwg.mxu0
        %498 = vst [vmem:[#allocation2] sm:$0xff] %v456
        %499 = vst [vmem:[#allocation2 + $0x8] sm:$0xff] %v476
        %500 = vst [vmem:[#allocation2 + $0x10] sm:$0xff] %v496
        %v501 = vld [vmem:[#allocation2] sm:$0xff]
        %v502 = vld [vmem:[#allocation2 + $0x8] sm:$0xff]
        %v503 = vld [vmem:[#allocation2 + $0x10] sm:$0xff]
        %504 = vmatpush.msra.mxu0 0.0
        %505 = vmatpush.msra.mxu0 0.0
        %506 = vmatpush.msra.mxu0 0.0
        %507 = vmatpush.msra.mxu0 0.0
        %508 = vmatpush.msra.mxu0 0.0
        %509 = vmatpush.msra.mxu0 0.0
        %510 = vmatpush.msra.mxu0 0.0
        %511 = vmatpush.msra.mxu0 0.0
        %512 = vmatpush.msra.mxu0 0.0
        %513 = vmatpush.msra.mxu0 0.0
        %514 = vmatpush.msra.mxu0 0.0
        %515 = vmatpush.msra.mxu0 0.0
        %516 = vmatpush.msra.mxu0 0.0
        %517 = vmatpush.msra.mxu0 %v503
        %518 = vmatpush.msra.mxu0 %v502
        %519 = vmatpush.msra.mxu0 %v501
        %520 = vmatmul.f32.gmra.mxu0 %v407
        %v521 = vpop.f32.mrf.mxu0
        %v522 = vadd.f32 %v336, %v521
        %523 = vmatmul.f32.gmra.mxu0 %v410
        %v524 = vpop.f32.mrf.mxu0
        %v525 = vadd.f32 %v337, %v524
        %526 = vdwg.mxu0
        %527 = vst [vmem:[%s283 + $0x8] sm:$0xff] %v522
        %528 = vst [vmem:[%s283 + $0x48] sm:$0xff] %v525
        %v529 = vld [vmem:[%s243 + $0x10] sm:$0xff]
        %530 = vmatpush.msra.mxu0 %v331
        %531 = vmatpush.msra.mxu0 %v328
        %532 = vmatpush.msra.mxu0 %v325
        %533 = vmatpush.msra.mxu0 %v322
        %534 = vmatpush.msra.mxu0 %v319
        %535 = vmatpush.msra.mxu0 %v316
        %536 = vmatpush.msra.mxu0 %v313
        %537 = vmatpush.msra.mxu0 %v310
        %538 = vmatpush.msra.mxu0 %v307
        %539 = vmatpush.msra.mxu0 %v304
        %540 = vmatpush.msra.mxu0 %v301
        %541 = vmatpush.msra.mxu0 %v298
        %542 = vmatpush.msra.mxu0 %v295
        %543 = vmatpush.msra.mxu0 %v292
        %544 = vmatpush.msra.mxu0 %v289
        %545 = vmatpush.msra.mxu0 %v286
        %546 = vmatmul.f32.gmra.mxu0 %v529
        %v547 = vpop.f32.mrf.mxu0
        %v548 = vadd.f32 0.0, %v547
        %549 = vdwg.mxu0
        %550 = vmatpush.msra.mxu0 %v332
        %551 = vmatpush.msra.mxu0 %v329
        %552 = vmatpush.msra.mxu0 %v326
        %553 = vmatpush.msra.mxu0 %v323
        %554 = vmatpush.msra.mxu0 %v320
        %555 = vmatpush.msra.mxu0 %v317
        %556 = vmatpush.msra.mxu0 %v314
        %557 = vmatpush.msra.mxu0 %v311
        %558 = vmatpush.msra.mxu0 %v308
        %559 = vmatpush.msra.mxu0 %v305
        %560 = vmatpush.msra.mxu0 %v302
        %561 = vmatpush.msra.mxu0 %v299
        %562 = vmatpush.msra.mxu0 %v296
        %563 = vmatpush.msra.mxu0 %v293
        %564 = vmatpush.msra.mxu0 %v290
        %565 = vmatpush.msra.mxu0 %v287
        %566 = vmatmul.f32.gmra.mxu0 %v529
        %v567 = vpop.f32.mrf.mxu0
        %v568 = vadd.f32 0.0, %v567
        %569 = vdwg.mxu0
        %570 = vmatpush.msra.mxu0 %v333
        %571 = vmatpush.msra.mxu0 %v330
        %572 = vmatpush.msra.mxu0 %v327
        %573 = vmatpush.msra.mxu0 %v324
        %574 = vmatpush.msra.mxu0 %v321
        %575 = vmatpush.msra.mxu0 %v318
        %576 = vmatpush.msra.mxu0 %v315
        %577 = vmatpush.msra.mxu0 %v312
        %578 = vmatpush.msra.mxu0 %v309
        %579 = vmatpush.msra.mxu0 %v306
        %580 = vmatpush.msra.mxu0 %v303
        %581 = vmatpush.msra.mxu0 %v300
        %582 = vmatpush.msra.mxu0 %v297
        %583 = vmatpush.msra.mxu0 %v294
        %584 = vmatpush.msra.mxu0 %v291
        %585 = vmatpush.msra.mxu0 %v288
        %586 = vmatmul.f32.gmra.mxu0 %v529
        %v587 = vpop.f32.mrf.mxu0
        %v588 = vadd.f32 0.0, %v587
        %589 = vdwg.mxu0
        %590 = vst [vmem:[#allocation2] sm:$0xff] %v548
        %591 = vst [vmem:[#allocation2 + $0x8] sm:$0xff] %v568
        %592 = vst [vmem:[#allocation2 + $0x10] sm:$0xff] %v588
        %v593 = vld [vmem:[#allocation2] sm:$0xff]
        %v594 = vld [vmem:[#allocation2 + $0x8] sm:$0xff]
        %v595 = vld [vmem:[#allocation2 + $0x10] sm:$0xff]
        %596 = vmatpush.msra.mxu0 0.0
        %597 = vmatpush.msra.mxu0 0.0
        %598 = vmatpush.msra.mxu0 0.0
        %599 = vmatpush.msra.mxu0 0.0
        %600 = vmatpush.msra.mxu0 0.0
        %601 = vmatpush.msra.mxu0 0.0
        %602 = vmatpush.msra.mxu0 0.0
        %603 = vmatpush.msra.mxu0 0.0
        %604 = vmatpush.msra.mxu0 0.0
        %605 = vmatpush.msra.mxu0 0.0
        %606 = vmatpush.msra.mxu0 0.0
        %607 = vmatpush.msra.mxu0 0.0
        %608 = vmatpush.msra.mxu0 0.0
        %609 = vmatpush.msra.mxu0 %v595
        %610 = vmatpush.msra.mxu0 %v594
        %611 = vmatpush.msra.mxu0 %v593
        %612 = vmatmul.f32.gmra.mxu0 %v407
        %v613 = vpop.f32.mrf.mxu0
        %v614 = vadd.f32 %v336, %v613
        %615 = vmatmul.f32.gmra.mxu0 %v410
        %v616 = vpop.f32.mrf.mxu0
        %v617 = vadd.f32 %v337, %v616
        %618 = vdwg.mxu0
        %619 = vst [vmem:[%s283 + $0x10] sm:$0xff] %v614
        %620 = vst [vmem:[%s283 + $0x50] sm:$0xff] %v617
        %v621 = vld [vmem:[%s243 + $0x18] sm:$0xff]
        %622 = vmatpush.msra.mxu0 %v331
        %623 = vmatpush.msra.mxu0 %v328
        %624 = vmatpush.msra.mxu0 %v325
        %625 = vmatpush.msra.mxu0 %v322
        %626 = vmatpush.msra.mxu0 %v319
        %627 = vmatpush.msra.mxu0 %v316
        %628 = vmatpush.msra.mxu0 %v313
        %629 = vmatpush.msra.mxu0 %v310
        %630 = vmatpush.msra.mxu0 %v307
        %631 = vmatpush.msra.mxu0 %v304
        %632 = vmatpush.msra.mxu0 %v301
        %633 = vmatpush.msra.mxu0 %v298
        %634 = vmatpush.msra.mxu0 %v295
        %635 = vmatpush.msra.mxu0 %v292
        %636 = vmatpush.msra.mxu0 %v289
        %637 = vmatpush.msra.mxu0 %v286
        %638 = vmatmul.f32.gmra.mxu0 %v621
        %v639 = vpop.f32.mrf.mxu0
        %v640 = vadd.f32 0.0, %v639
        %641 = vdwg.mxu0
        %642 = vmatpush.msra.mxu0 %v332
        %643 = vmatpush.msra.mxu0 %v329
        %644 = vmatpush.msra.mxu0 %v326
        %645 = vmatpush.msra.mxu0 %v323
        %646 = vmatpush.msra.mxu0 %v320
        %647 = vmatpush.msra.mxu0 %v317
        %648 = vmatpush.msra.mxu0 %v314
        %649 = vmatpush.msra.mxu0 %v311
        %650 = vmatpush.msra.mxu0 %v308
        %651 = vmatpush.msra.mxu0 %v305
        %652 = vmatpush.msra.mxu0 %v302
        %653 = vmatpush.msra.mxu0 %v299
        %654 = vmatpush.msra.mxu0 %v296
        %655 = vmatpush.msra.mxu0 %v293
        %656 = vmatpush.msra.mxu0 %v290
        %657 = vmatpush.msra.mxu0 %v287
        %658 = vmatmul.f32.gmra.mxu0 %v621
        %v659 = vpop.f32.mrf.mxu0
        %v660 = vadd.f32 0.0, %v659
        %661 = vdwg.mxu0
        %662 = vmatpush.msra.mxu0 %v333
        %663 = vmatpush.msra.mxu0 %v330
        %664 = vmatpush.msra.mxu0 %v327
        %665 = vmatpush.msra.mxu0 %v324
        %666 = vmatpush.msra.mxu0 %v321
        %667 = vmatpush.msra.mxu0 %v318
        %668 = vmatpush.msra.mxu0 %v315
        %669 = vmatpush.msra.mxu0 %v312
        %670 = vmatpush.msra.mxu0 %v309
        %671 = vmatpush.msra.mxu0 %v306
        %672 = vmatpush.msra.mxu0 %v303
        %673 = vmatpush.msra.mxu0 %v300
        %674 = vmatpush.msra.mxu0 %v297
        %675 = vmatpush.msra.mxu0 %v294
        %676 = vmatpush.msra.mxu0 %v291
        %677 = vmatpush.msra.mxu0 %v288
        %678 = vmatmul.f32.gmra.mxu0 %v621
        %v679 = vpop.f32.mrf.mxu0
        %v680 = vadd.f32 0.0, %v679
        %681 = vdwg.mxu0
        %682 = vst [vmem:[#allocation2] sm:$0xff] %v640
        %683 = vst [vmem:[#allocation2 + $0x8] sm:$0xff] %v660
        %684 = vst [vmem:[#allocation2 + $0x10] sm:$0xff] %v680
        %v685 = vld [vmem:[#allocation2] sm:$0xff]
        %v686 = vld [vmem:[#allocation2 + $0x8] sm:$0xff]
        %v687 = vld [vmem:[#allocation2 + $0x10] sm:$0xff]
        %688 = vmatpush.msra.mxu0 0.0
        %689 = vmatpush.msra.mxu0 0.0
        %690 = vmatpush.msra.mxu0 0.0
        %691 = vmatpush.msra.mxu0 0.0
        %692 = vmatpush.msra.mxu0 0.0
        %693 = vmatpush.msra.mxu0 0.0
        %694 = vmatpush.msra.mxu0 0.0
        %695 = vmatpush.msra.mxu0 0.0
        %696 = vmatpush.msra.mxu0 0.0
        %697 = vmatpush.msra.mxu0 0.0
        %698 = vmatpush.msra.mxu0 0.0
        %699 = vmatpush.msra.mxu0 0.0
        %700 = vmatpush.msra.mxu0 0.0
        %701 = vmatpush.msra.mxu0 %v687
        %702 = vmatpush.msra.mxu0 %v686
        %703 = vmatpush.msra.mxu0 %v685
        %704 = vmatmul.f32.gmra.mxu0 %v407
        %v705 = vpop.f32.mrf.mxu0
        %v706 = vadd.f32 %v336, %v705
        %707 = vmatmul.f32.gmra.mxu0 %v410
        %v708 = vpop.f32.mrf.mxu0
        %v709 = vadd.f32 %v337, %v708
        %710 = vdwg.mxu0
        %711 = vst [vmem:[%s283 + $0x18] sm:$0xff] %v706
        %712 = vst [vmem:[%s283 + $0x58] sm:$0xff] %v709
        %v713 = vld [vmem:[%s243 + $0x20] sm:$0xff]
        %714 = vmatpush.msra.mxu0 %v331
        %715 = vmatpush.msra.mxu0 %v328
        %716 = vmatpush.msra.mxu0 %v325
        %717 = vmatpush.msra.mxu0 %v322
        %718 = vmatpush.msra.mxu0 %v319
        %719 = vmatpush.msra.mxu0 %v316
        %720 = vmatpush.msra.mxu0 %v313
        %721 = vmatpush.msra.mxu0 %v310
        %722 = vmatpush.msra.mxu0 %v307
        %723 = vmatpush.msra.mxu0 %v304
        %724 = vmatpush.msra.mxu0 %v301
        %725 = vmatpush.msra.mxu0 %v298
        %726 = vmatpush.msra.mxu0 %v295
        %727 = vmatpush.msra.mxu0 %v292
        %728 = vmatpush.msra.mxu0 %v289
        %729 = vmatpush.msra.mxu0 %v286
        %730 = vmatmul.f32.gmra.mxu0 %v713
        %v731 = vpop.f32.mrf.mxu0
        %v732 = vadd.f32 0.0, %v731
        %733 = vdwg.mxu0
        %734 = vmatpush.msra.mxu0 %v332
        %735 = vmatpush.msra.mxu0 %v329
        %736 = vmatpush.msra.mxu0 %v326
        %737 = vmatpush.msra.mxu0 %v323
        %738 = vmatpush.msra.mxu0 %v320
        %739 = vmatpush.msra.mxu0 %v317
        %740 = vmatpush.msra.mxu0 %v314
        %741 = vmatpush.msra.mxu0 %v311
        %742 = vmatpush.msra.mxu0 %v308
        %743 = vmatpush.msra.mxu0 %v305
        %744 = vmatpush.msra.mxu0 %v302
        %745 = vmatpush.msra.mxu0 %v299
        %746 = vmatpush.msra.mxu0 %v296
        %747 = vmatpush.msra.mxu0 %v293
        %748 = vmatpush.msra.mxu0 %v290
        %749 = vmatpush.msra.mxu0 %v287
        %750 = vmatmul.f32.gmra.mxu0 %v713
        %v751 = vpop.f32.mrf.mxu0
        %v752 = vadd.f32 0.0, %v751
        %753 = vdwg.mxu0
        %754 = vmatpush.msra.mxu0 %v333
        %755 = vmatpush.msra.mxu0 %v330
        %756 = vmatpush.msra.mxu0 %v327
        %757 = vmatpush.msra.mxu0 %v324
        %758 = vmatpush.msra.mxu0 %v321
        %759 = vmatpush.msra.mxu0 %v318
        %760 = vmatpush.msra.mxu0 %v315
        %761 = vmatpush.msra.mxu0 %v312
        %762 = vmatpush.msra.mxu0 %v309
        %763 = vmatpush.msra.mxu0 %v306
        %764 = vmatpush.msra.mxu0 %v303
        %765 = vmatpush.msra.mxu0 %v300
        %766 = vmatpush.msra.mxu0 %v297
        %767 = vmatpush.msra.mxu0 %v294
        %768 = vmatpush.msra.mxu0 %v291
        %769 = vmatpush.msra.mxu0 %v288
        %770 = vmatmul.f32.gmra.mxu0 %v713
        %v771 = vpop.f32.mrf.mxu0
        %v772 = vadd.f32 0.0, %v771
        %773 = vdwg.mxu0
        %774 = vst [vmem:[#allocation2] sm:$0xff] %v732
        %775 = vst [vmem:[#allocation2 + $0x8] sm:$0xff] %v752
        %776 = vst [vmem:[#allocation2 + $0x10] sm:$0xff] %v772
        %v777 = vld [vmem:[#allocation2] sm:$0xff]
        %v778 = vld [vmem:[#allocation2 + $0x8] sm:$0xff]
        %v779 = vld [vmem:[#allocation2 + $0x10] sm:$0xff]
        %780 = vmatpush.msra.mxu0 0.0
        %781 = vmatpush.msra.mxu0 0.0
        %782 = vmatpush.msra.mxu0 0.0
        %783 = vmatpush.msra.mxu0 0.0
        %784 = vmatpush.msra.mxu0 0.0
        %785 = vmatpush.msra.mxu0 0.0
        %786 = vmatpush.msra.mxu0 0.0
        %787 = vmatpush.msra.mxu0 0.0
        %788 = vmatpush.msra.mxu0 0.0
        %789 = vmatpush.msra.mxu0 0.0
        %790 = vmatpush.msra.mxu0 0.0
        %791 = vmatpush.msra.mxu0 0.0
        %792 = vmatpush.msra.mxu0 0.0
        %793 = vmatpush.msra.mxu0 %v779
        %794 = vmatpush.msra.mxu0 %v778
        %795 = vmatpush.msra.mxu0 %v777
        %796 = vmatmul.f32.gmra.mxu0 %v407
        %v797 = vpop.f32.mrf.mxu0
        %v798 = vadd.f32 %v336, %v797
        %799 = vmatmul.f32.gmra.mxu0 %v410
        %v800 = vpop.f32.mrf.mxu0
        %v801 = vadd.f32 %v337, %v800
        %802 = vdwg.mxu0
        %803 = vst [vmem:[%s283 + $0x20] sm:$0xff] %v798
        %804 = vst [vmem:[%s283 + $0x60] sm:$0xff] %v801
        %v805 = vld [vmem:[%s243 + $0x28] sm:$0xff]
        %806 = vmatpush.msra.mxu0 %v331
        %807 = vmatpush.msra.mxu0 %v328
        %808 = vmatpush.msra.mxu0 %v325
        %809 = vmatpush.msra.mxu0 %v322
        %810 = vmatpush.msra.mxu0 %v319
        %811 = vmatpush.msra.mxu0 %v316
        %812 = vmatpush.msra.mxu0 %v313
        %813 = vmatpush.msra.mxu0 %v310
        %814 = vmatpush.msra.mxu0 %v307
        %815 = vmatpush.msra.mxu0 %v304
        %816 = vmatpush.msra.mxu0 %v301
        %817 = vmatpush.msra.mxu0 %v298
        %818 = vmatpush.msra.mxu0 %v295
        %819 = vmatpush.msra.mxu0 %v292
        %820 = vmatpush.msra.mxu0 %v289
        %821 = vmatpush.msra.mxu0 %v286
        %822 = vmatmul.f32.gmra.mxu0 %v805
        %v823 = vpop.f32.mrf.mxu0
        %v824 = vadd.f32 0.0, %v823
        %825 = vdwg.mxu0
        %826 = vmatpush.msra.mxu0 %v332
        %827 = vmatpush.msra.mxu0 %v329
        %828 = vmatpush.msra.mxu0 %v326
        %829 = vmatpush.msra.mxu0 %v323
        %830 = vmatpush.msra.mxu0 %v320
        %831 = vmatpush.msra.mxu0 %v317
        %832 = vmatpush.msra.mxu0 %v314
        %833 = vmatpush.msra.mxu0 %v311
        %834 = vmatpush.msra.mxu0 %v308
        %835 = vmatpush.msra.mxu0 %v305
        %836 = vmatpush.msra.mxu0 %v302
        %837 = vmatpush.msra.mxu0 %v299
        %838 = vmatpush.msra.mxu0 %v296
        %839 = vmatpush.msra.mxu0 %v293
        %840 = vmatpush.msra.mxu0 %v290
        %841 = vmatpush.msra.mxu0 %v287
        %842 = vmatmul.f32.gmra.mxu0 %v805
        %v843 = vpop.f32.mrf.mxu0
        %v844 = vadd.f32 0.0, %v843
        %845 = vdwg.mxu0
        %846 = vmatpush.msra.mxu0 %v333
        %847 = vmatpush.msra.mxu0 %v330
        %848 = vmatpush.msra.mxu0 %v327
        %849 = vmatpush.msra.mxu0 %v324
        %850 = vmatpush.msra.mxu0 %v321
        %851 = vmatpush.msra.mxu0 %v318
        %852 = vmatpush.msra.mxu0 %v315
        %853 = vmatpush.msra.mxu0 %v312
        %854 = vmatpush.msra.mxu0 %v309
        %855 = vmatpush.msra.mxu0 %v306
        %856 = vmatpush.msra.mxu0 %v303
        %857 = vmatpush.msra.mxu0 %v300
        %858 = vmatpush.msra.mxu0 %v297
        %859 = vmatpush.msra.mxu0 %v294
        %860 = vmatpush.msra.mxu0 %v291
        %861 = vmatpush.msra.mxu0 %v288
        %862 = vmatmul.f32.gmra.mxu0 %v805
        %v863 = vpop.f32.mrf.mxu0
        %v864 = vadd.f32 0.0, %v863
        %865 = vdwg.mxu0
        %866 = vst [vmem:[#allocation2] sm:$0xff] %v824
        %867 = vst [vmem:[#allocation2 + $0x8] sm:$0xff] %v844
        %868 = vst [vmem:[#allocation2 + $0x10] sm:$0xff] %v864
        %v869 = vld [vmem:[#allocation2] sm:$0xff]
        %v870 = vld [vmem:[#allocation2 + $0x8] sm:$0xff]
        %v871 = vld [vmem:[#allocation2 + $0x10] sm:$0xff]
        %872 = vmatpush.msra.mxu0 0.0
        %873 = vmatpush.msra.mxu0 0.0
        %874 = vmatpush.msra.mxu0 0.0
        %875 = vmatpush.msra.mxu0 0.0
        %876 = vmatpush.msra.mxu0 0.0
        %877 = vmatpush.msra.mxu0 0.0
        %878 = vmatpush.msra.mxu0 0.0
        %879 = vmatpush.msra.mxu0 0.0
        %880 = vmatpush.msra.mxu0 0.0
        %881 = vmatpush.msra.mxu0 0.0
        %882 = vmatpush.msra.mxu0 0.0
        %883 = vmatpush.msra.mxu0 0.0
        %884 = vmatpush.msra.mxu0 0.0
        %885 = vmatpush.msra.mxu0 %v871
        %886 = vmatpush.msra.mxu0 %v870
        %887 = vmatpush.msra.mxu0 %v869
        %888 = vmatmul.f32.gmra.mxu0 %v407
        %v889 = vpop.f32.mrf.mxu0
        %v890 = vadd.f32 %v336, %v889
        %891 = vmatmul.f32.gmra.mxu0 %v410
        %v892 = vpop.f32.mrf.mxu0
        %v893 = vadd.f32 %v337, %v892
        %894 = vdwg.mxu0
        %895 = vst [vmem:[%s283 + $0x28] sm:$0xff] %v890
        %896 = vst [vmem:[%s283 + $0x68] sm:$0xff] %v893
        %v897 = vld [vmem:[%s243 + $0x30] sm:$0xff]
        %898 = vmatpush.msra.mxu0 %v331
        %899 = vmatpush.msra.mxu0 %v328
        %900 = vmatpush.msra.mxu0 %v325
        %901 = vmatpush.msra.mxu0 %v322
        %902 = vmatpush.msra.mxu0 %v319
        %903 = vmatpush.msra.mxu0 %v316
        %904 = vmatpush.msra.mxu0 %v313
        %905 = vmatpush.msra.mxu0 %v310
        %906 = vmatpush.msra.mxu0 %v307
        %907 = vmatpush.msra.mxu0 %v304
        %908 = vmatpush.msra.mxu0 %v301
        %909 = vmatpush.msra.mxu0 %v298
        %910 = vmatpush.msra.mxu0 %v295
        %911 = vmatpush.msra.mxu0 %v292
        %912 = vmatpush.msra.mxu0 %v289
        %913 = vmatpush.msra.mxu0 %v286
        %914 = vmatmul.f32.gmra.mxu0 %v897
        %v915 = vpop.f32.mrf.mxu0
        %v916 = vadd.f32 0.0, %v915
        %917 = vdwg.mxu0
        %918 = vmatpush.msra.mxu0 %v332
        %919 = vmatpush.msra.mxu0 %v329
        %920 = vmatpush.msra.mxu0 %v326
        %921 = vmatpush.msra.mxu0 %v323
        %922 = vmatpush.msra.mxu0 %v320
        %923 = vmatpush.msra.mxu0 %v317
        %924 = vmatpush.msra.mxu0 %v314
        %925 = vmatpush.msra.mxu0 %v311
        %926 = vmatpush.msra.mxu0 %v308
        %927 = vmatpush.msra.mxu0 %v305
        %928 = vmatpush.msra.mxu0 %v302
        %929 = vmatpush.msra.mxu0 %v299
        %930 = vmatpush.msra.mxu0 %v296
        %931 = vmatpush.msra.mxu0 %v293
        %932 = vmatpush.msra.mxu0 %v290
        %933 = vmatpush.msra.mxu0 %v287
        %934 = vmatmul.f32.gmra.mxu0 %v897
        %v935 = vpop.f32.mrf.mxu0
        %v936 = vadd.f32 0.0, %v935
        %937 = vdwg.mxu0
        %938 = vmatpush.msra.mxu0 %v333
        %939 = vmatpush.msra.mxu0 %v330
        %940 = vmatpush.msra.mxu0 %v327
        %941 = vmatpush.msra.mxu0 %v324
        %942 = vmatpush.msra.mxu0 %v321
        %943 = vmatpush.msra.mxu0 %v318
        %944 = vmatpush.msra.mxu0 %v315
        %945 = vmatpush.msra.mxu0 %v312
        %946 = vmatpush.msra.mxu0 %v309
        %947 = vmatpush.msra.mxu0 %v306
        %948 = vmatpush.msra.mxu0 %v303
        %949 = vmatpush.msra.mxu0 %v300
        %950 = vmatpush.msra.mxu0 %v297
        %951 = vmatpush.msra.mxu0 %v294
        %952 = vmatpush.msra.mxu0 %v291
        %953 = vmatpush.msra.mxu0 %v288
        %954 = vmatmul.f32.gmra.mxu0 %v897
        %v955 = vpop.f32.mrf.mxu0
        %v956 = vadd.f32 0.0, %v955
        %957 = vdwg.mxu0
        %958 = vst [vmem:[#allocation2] sm:$0xff] %v916
        %959 = vst [vmem:[#allocation2 + $0x8] sm:$0xff] %v936
        %960 = vst [vmem:[#allocation2 + $0x10] sm:$0xff] %v956
        %v961 = vld [vmem:[#allocation2] sm:$0xff]
        %v962 = vld [vmem:[#allocation2 + $0x8] sm:$0xff]
        %v963 = vld [vmem:[#allocation2 + $0x10] sm:$0xff]
        %964 = vmatpush.msra.mxu0 0.0
        %965 = vmatpush.msra.mxu0 0.0
        %966 = vmatpush.msra.mxu0 0.0
        %967 = vmatpush.msra.mxu0 0.0
        %968 = vmatpush.msra.mxu0 0.0
        %969 = vmatpush.msra.mxu0 0.0
        %970 = vmatpush.msra.mxu0 0.0
        %971 = vmatpush.msra.mxu0 0.0
        %972 = vmatpush.msra.mxu0 0.0
        %973 = vmatpush.msra.mxu0 0.0
        %974 = vmatpush.msra.mxu0 0.0
        %975 = vmatpush.msra.mxu0 0.0
        %976 = vmatpush.msra.mxu0 0.0
        %977 = vmatpush.msra.mxu0 %v963
        %978 = vmatpush.msra.mxu0 %v962
        %979 = vmatpush.msra.mxu0 %v961
        %980 = vmatmul.f32.gmra.mxu0 %v407
        %v981 = vpop.f32.mrf.mxu0
        %v982 = vadd.f32 %v336, %v981
        %983 = vmatmul.f32.gmra.mxu0 %v410
        %v984 = vpop.f32.mrf.mxu0
        %v985 = vadd.f32 %v337, %v984
        %986 = vdwg.mxu0
        %987 = vst [vmem:[%s283 + $0x30] sm:$0xff] %v982
        %988 = vst [vmem:[%s283 + $0x70] sm:$0xff] %v985
        %v989 = vld [vmem:[%s243 + $0x38] sm:$0xff]
        %990 = vmatpush.msra.mxu0 %v331
        %991 = vmatpush.msra.mxu0 %v328
        %992 = vmatpush.msra.mxu0 %v325
        %993 = vmatpush.msra.mxu0 %v322
        %994 = vmatpush.msra.mxu0 %v319
        %995 = vmatpush.msra.mxu0 %v316
        %996 = vmatpush.msra.mxu0 %v313
        %997 = vmatpush.msra.mxu0 %v310
        %998 = vmatpush.msra.mxu0 %v307
        %999 = vmatpush.msra.mxu0 %v304
        %1000 = vmatpush.msra.mxu0 %v301
        %1001 = vmatpush.msra.mxu0 %v298
        %1002 = vmatpush.msra.mxu0 %v295
        %1003 = vmatpush.msra.mxu0 %v292
        %1004 = vmatpush.msra.mxu0 %v289
        %1005 = vmatpush.msra.mxu0 %v286
        %1006 = vmatmul.f32.gmra.mxu0 %v989
        %v1007 = vpop.f32.mrf.mxu0
        %v1008 = vadd.f32 0.0, %v1007
        %1009 = vdwg.mxu0
        %1010 = vmatpush.msra.mxu0 %v332
        %1011 = vmatpush.msra.mxu0 %v329
        %1012 = vmatpush.msra.mxu0 %v326
        %1013 = vmatpush.msra.mxu0 %v323
        %1014 = vmatpush.msra.mxu0 %v320
        %1015 = vmatpush.msra.mxu0 %v317
        %1016 = vmatpush.msra.mxu0 %v314
        %1017 = vmatpush.msra.mxu0 %v311
        %1018 = vmatpush.msra.mxu0 %v308
        %1019 = vmatpush.msra.mxu0 %v305
        %1020 = vmatpush.msra.mxu0 %v302
        %1021 = vmatpush.msra.mxu0 %v299
        %1022 = vmatpush.msra.mxu0 %v296
        %1023 = vmatpush.msra.mxu0 %v293
        %1024 = vmatpush.msra.mxu0 %v290
        %1025 = vmatpush.msra.mxu0 %v287
        %1026 = vmatmul.f32.gmra.mxu0 %v989
        %v1027 = vpop.f32.mrf.mxu0
        %v1028 = vadd.f32 0.0, %v1027
        %1029 = vdwg.mxu0
        %1030 = vmatpush.msra.mxu0 %v333
        %1031 = vmatpush.msra.mxu0 %v330
        %1032 = vmatpush.msra.mxu0 %v327
        %1033 = vmatpush.msra.mxu0 %v324
        %1034 = vmatpush.msra.mxu0 %v321
        %1035 = vmatpush.msra.mxu0 %v318
        %1036 = vmatpush.msra.mxu0 %v315
        %1037 = vmatpush.msra.mxu0 %v312
        %1038 = vmatpush.msra.mxu0 %v309
        %1039 = vmatpush.msra.mxu0 %v306
        %1040 = vmatpush.msra.mxu0 %v303
        %1041 = vmatpush.msra.mxu0 %v300
        %1042 = vmatpush.msra.mxu0 %v297
        %1043 = vmatpush.msra.mxu0 %v294
        %1044 = vmatpush.msra.mxu0 %v291
        %1045 = vmatpush.msra.mxu0 %v288
        %1046 = vmatmul.f32.gmra.mxu0 %v989
        %v1047 = vpop.f32.mrf.mxu0
        %v1048 = vadd.f32 0.0, %v1047
        %1049 = vdwg.mxu0
        %1050 = vst [vmem:[#allocation2] sm:$0xff] %v1008
        %1051 = vst [vmem:[#allocation2 + $0x8] sm:$0xff] %v1028
        %1052 = vst [vmem:[#allocation2 + $0x10] sm:$0xff] %v1048
        %v1053 = vld [vmem:[#allocation2] sm:$0xff]
        %v1054 = vld [vmem:[#allocation2 + $0x8] sm:$0xff]
        %v1055 = vld [vmem:[#allocation2 + $0x10] sm:$0xff]
        %1056 = vmatpush.msra.mxu0 0.0
        %1057 = vmatpush.msra.mxu0 0.0
        %1058 = vmatpush.msra.mxu0 0.0
        %1059 = vmatpush.msra.mxu0 0.0
        %1060 = vmatpush.msra.mxu0 0.0
        %1061 = vmatpush.msra.mxu0 0.0
        %1062 = vmatpush.msra.mxu0 0.0
        %1063 = vmatpush.msra.mxu0 0.0
        %1064 = vmatpush.msra.mxu0 0.0
        %1065 = vmatpush.msra.mxu0 0.0
        %1066 = vmatpush.msra.mxu0 0.0
        %1067 = vmatpush.msra.mxu0 0.0
        %1068 = vmatpush.msra.mxu0 0.0
        %1069 = vmatpush.msra.mxu0 %v1055
        %1070 = vmatpush.msra.mxu0 %v1054
        %1071 = vmatpush.msra.mxu0 %v1053
        %1072 = vmatmul.f32.gmra.mxu0 %v407
        %v1073 = vpop.f32.mrf.mxu0
        %v1074 = vadd.f32 %v336, %v1073
        %1075 = vmatmul.f32.gmra.mxu0 %v410
        %v1076 = vpop.f32.mrf.mxu0
        %v1077 = vadd.f32 %v337, %v1076
        %1078 = vdwg.mxu0
        %1079 = vst [vmem:[%s283 + $0x38] sm:$0xff] %v1074
        %1080 = vst [vmem:[%s283 + $0x78] sm:$0xff] %v1077
        %s1081 = sand.u32 %s136, 1
        %s1082 = scalar_lea.sflag [#allocation5], %s1081
        %s1083 = sand.u32 %s136, 1
        %s1084 = smul.addr %s1083, 128
        %s1085 = scalar_lea.vmem [#allocation11], %s1084
        // Predicated region
        $region53: #{tpu_custom_call.1} parent=35 // pred_check
          %p1086 = pneg %p146
        $region54: #{tpu_custom_call.1} parent=35 // pred_check_branch
          %1088 = sbr.rel (%p1086) target = $region56
        $region55: #{tpu_custom_call.1} parent=35 // pred_region
          %s1089 = smul.u32 8, %s28
          %1091 = vsyncadd %s1082, 0
          %s1092 = smul.addr %s27, 16
          %s1093 = sadd.s32 %s1089, %s1092
          %s1094 = smul.addr %s1093, 8
          %s1095 = scalar_lea.hbm %s4, %s1094
          %s1096 = sshll.u32 %s1085, 4
          %s1097 = int_to_ptr.vmem [resolvable:$true] %s1096
          %s1098 = sshll.u32 %s1095, 4
          %s1099 = int_to_ptr.hbm [resolvable:$true] %s1098
          %1104 = dma.vmem_to_hbm [thread:$0]  %s1097, 2048, %s1099, %s1082, 1024, 1024, 64
        $region56: #{tpu_custom_call.1} parent=35 // pred_fallthru
          _
      $region36: #{tpu_custom_call.1} parent=5 // pred_fallthru
        _
      %p1105 = scmp.le.s32.totalorder 2, %s18
      // Predicated region
      $region57: #{tpu_custom_call.1} parent=5 // pred_check
        %p1106 = pneg %p1105
      $region58: #{tpu_custom_call.1} parent=5 // pred_check_branch
        %1108 = sbr.rel (%p1106) target = $region60
      $region59: #{tpu_custom_call.1} parent=5 // pred_region
        %s1109 = ssub.s32 %s18, 2
        // Predicated region
        $region61: #{tpu_custom_call.1} parent=59 // pred_check
          %p1110 = pneg %p152
        $region62: #{tpu_custom_call.1} parent=59 // pred_check_branch
          %1112 = sbr.rel (%p1110) target = $region64
        $region63: #{tpu_custom_call.1} parent=59 // pred_region
          %s1113 = sand.u32 %s137, 1
          %s1114 = scalar_lea.sflag [#allocation5], %s1113
          %s1115 = sand.u32 %s137, 1
          %s1116 = smul.addr %s1115, 128
          %s1117 = scalar_lea.vmem [#allocation11], %s1116
          %1119 = dma.done %s1114, 2048
        $region64: #{tpu_custom_call.1} parent=59 // pred_fallthru
          _
      $region60: #{tpu_custom_call.1} parent=5 // pred_fallthru
        _
    $region6: #{tpu_custom_call.1} parent=1 // loop_footer
      %s22 = sadd.s32 1, %s18
    $region7: #{tpu_custom_call.1} parent=1 // loop_footer_branch
      %17 = sbr.rel target = $region3
    $region8: #{tpu_custom_call.1} parent=1 // loop_exit
      _
    %1120 = vsyncpa [#allocation4], 1
    %s1121 = scalar_lea.sflag [#allocation4], 1
    %1122 = vsyncpa %s1121, 1
    %1123 = vsyncpa [#allocation7], 1
    %1124 = vsyncpa [#allocation10], 1
    %1125 = vsyncpa [#allocation5], 1
    %s1126 = scalar_lea.sflag [#allocation5], 1
    %1127 = vsyncpa %s1126, 1

</llo_original>
